<compile_context>
chip_gen: v6e
topology: v6e:2x2x1
jax: 0.10.0
libtpu: 0.0.40
codegen_flags: <defaults>
</compile_context>

<pallas_src>
import functools

import jax
import jax.numpy as jnp
import numpy as np
from jax import lax
from jax.experimental import pallas as pl
from jax.experimental.pallas import tpu as pltpu


def _roundup(a, m):
    return -(-a // m) * m


def _tpu_vmem_and_cores():
    """Best-effort chip query: (VMEM bytes per TensorCore, TensorCores per chip)."""
    vmem = 64 * 2**20          # v7x per-TC VMEM: the smallest across v5e/v6e/v7x
    cores = 1                  # v5e / v6e are single-TC
    try:
        info = pltpu.get_tpu_info()
        vmem = int(getattr(info, "vmem_capacity_bytes", vmem) or vmem)
        for name in ("num_tensorcores", "tensorcores_per_chip", "num_cores",
                     "cores_per_chip"):
            val = getattr(info, name, None)
            if val:
                cores = int(val)
                break
    except Exception:
        pass
    return vmem, cores


def _choose_tiling(B, max_tb, cores):
    """Pick (tb, nb) with nb*tb >= B.

    tb is either == padded B (single block) or a multiple of 8 so the leading
    block dim of the 2-D (B, H*W) / (B*H, W) layouts stays tile-aligned.
    Single-TC chips take the largest tile that fits (fewer 0.35us grid steps);
    2-TC chips prefer >= 2 equal blocks when the batch is big enough to benefit.
    """
    max_tb = max(1, int(max_tb))
    if B <= max_tb and not (cores >= 2 and B > 8):
        return B, 1                                   # one block, one grid step
    tb_cap = max(8, (max_tb // 8) * 8)
    if cores >= 2:
        tb = min(_roundup(-(-B // 2), 8), tb_cap)     # aim for >= 2 blocks
    else:
        tb = tb_cap
    nb = -(-B // tb)
    if cores >= 2 and nb > 1 and nb % 2 == 1:
        # Prefer an even block count so both TensorCores stay busy.
        tb2 = max(8, _roundup(-(-B // (nb + 1)), 8))
        if tb2 <= tb_cap:
            tb = tb2
            nb = -(-B // tb)
    return tb, nb


def _amp_fused_kernel(x_ref, y_ref, basis_ref, o_ref, *, fpad):
    """Small-image path: one fused 2-D rDFT matmul per tensor per block.

    x_ref, y_ref : (TB, H*W)       flattened images, native dtype (bf16 or f32)
    basis_ref    : (H*W, 2*fpad)   [Re | Im] fused rfft2 basis, lane padded
    o_ref        : (1, 8, fpad)    per-lane partial L1 sums (row 0 is the data)
    """
    f32 = jnp.float32
    basis = basis_ref[...]
    # Two dots against the same resident RHS (no in-kernel concat copies).
    zx = jnp.dot(x_ref[...], basis, preferred_element_type=f32)   # (TB, 2*fpad)
    zy = jnp.dot(y_ref[...], basis, preferred_element_type=f32)
    rex, imx = zx[:, :fpad], zx[:, fpad:]      # 128-aligned lane slices
    rey, imy = zy[:, :fpad], zy[:, fpad:]
    mag_x = jnp.sqrt(rex * rex + imx * imx)
    mag_y = jnp.sqrt(rey * rey + imy * imy)
    partial = jnp.sum(jnp.abs(mag_x - mag_y), axis=0, keepdims=True)   # (1, fpad)
    o_ref[...] = jnp.broadcast_to(partial.reshape(1, 1, fpad), o_ref.shape)


def _amp_separable_kernel(x_ref, y_ref, cws_ref, chs_ref, o_ref,
                          s1x_ref, s1y_ref, *, tb, H, wp):
    """Large-image path: separable DFT (W then H), no concats, fori_loop over TB.

    x_ref, y_ref : (TB*H, W)       images stacked on rows, native dtype
    cws_ref      : (W, 2*wp)       width rFFT basis [cos | -sin], lane padded
    chs_ref      : (2*H, H)        height FFT basis [cos ; sin], f32
    o_ref        : (1, 8, wp)      per-lane partial L1 sums (row 0 is the data)
    s1*_ref      : (TB*H, 2*wp)    f32 VMEM scratch for stage-1 results
    """
    f32 = jnp.float32
    cws = cws_ref[...]
    # Stage 1 (rDFT along W): two dots against the same resident RHS, no concat.
    s1x_ref[...] = jnp.dot(x_ref[...], cws, preferred_element_type=f32)
    s1y_ref[...] = jnp.dot(y_ref[...], cws, preferred_element_type=f32)
    chs = chs_ref[...]

    def _mag(u):                          # u = [cos; sin] @ [Re1 | Im1]
        re2 = u[:H, :wp] + u[H:, wp:]
        im2 = u[:H, wp:] - u[H:, :wp]
        return jnp.sqrt(re2 * re2 + im2 * im2)

    def _body(t, partial):
        r0 = t * H
        if H % 8 == 0:
            r0 = pl.multiple_of(r0, 8)    # sublane-aligned slice hint
        zx = s1x_ref[pl.ds(r0, H), :]
        zy = s1y_ref[pl.ds(r0, H), :]
        # Stage 2 (FFT along H): two dots per image pair, no lane-concat copy.
        ux = jnp.dot(chs, zx, preferred_element_type=f32)
        uy = jnp.dot(chs, zy, preferred_element_type=f32)
        return partial + jnp.sum(jnp.abs(_mag(ux) - _mag(uy)), axis=0,
                                 keepdims=True)

    # fori_loop (not a static unroll) bounds the live vreg set; unroll=2 still
    # lets the LLO scheduler pipeline consecutive iterations.
    partial = lax.fori_loop(0, tb, _body, jnp.zeros((1, wp), f32), unroll=2)
    o_ref[...] = jnp.broadcast_to(partial.reshape(1, 1, wp), o_ref.shape)


def amp_loss(x, y, *, max_fused_basis_bytes=6 * 2**20):
    """AMPLoss.forward: mean | |rfft2(x)| - |rfft2(y)| | over (N, C, H, W//2+1)."""
    assert x.shape == y.shape and x.ndim == 4
    N, C, H, W = x.shape
    B = N * C
    Wr = W // 2 + 1

    # bf16 inputs feed the MXU natively (bf16 bases); everything else runs f32
    # so f32 inputs keep the 1e-4 accuracy of the reference.
    compute_dtype = jnp.bfloat16 if x.dtype == jnp.bfloat16 else jnp.float32
    x = x.astype(compute_dtype)
    y = y.astype(compute_dtype)
    isz = jnp.dtype(compute_dtype).itemsize

    vmem_cap, cores = _tpu_vmem_and_cores()
    vmem_limit = int(min(vmem_cap * 0.85, 110 * 2**20))
    budget = int(vmem_limit * 0.70)

    F = H * Wr
    fpad = _roundup(F, 128)      # fused-path lane-padded frequency axis
    wp = _roundup(Wr, 128)       # separable-path lane-padded frequency axis
    fused_basis_bytes = H * W * 2 * fpad * isz
    use_fused = fused_basis_bytes <= max_fused_basis_bytes

    # Conservative VMEM accounting (inputs double-buffered, bases counted twice
    # in case single-buffering is unavailable, plus live intermediates).
    if use_fused:
        per_img = 4 * H * W * isz + 7 * fpad * 4
        fixed = 2 * fused_basis_bytes + 2 * 8 * fpad * 4 + (2 << 20)
    else:
        per_img = 4 * H * W * isz + 4 * H * wp * 4
        fixed = (2 * (W * 2 * wp + 2 * H * H) * 4
                 + (8 * H * wp + 3 * H * wp) * 4
                 + 2 * 8 * wp * 4 + (2 << 20))
    max_tb = (budget - fixed) // per_img if budget > fixed + per_img else 1
    tb, nb = _choose_tiling(B, max_tb, cores)
    b_pad = tb * nb

    xb = x.reshape(B, H, W)
    yb = y.reshape(B, H, W)
    if b_pad != B:
        # Zero-padded images have |X| = |Y| = 0 and contribute nothing to the sum.
        pad = ((0, b_pad - B), (0, 0), (0, 0))
        xb = jnp.pad(xb, pad)
        yb = jnp.pad(yb, pad)

    # DFT bases (norm='backward' -> no scaling), built in float64 then cast.
    if use_fused:
        hh = np.arange(H, dtype=np.float64).reshape(H, 1, 1, 1)
        ww = np.arange(W, dtype=np.float64).reshape(1, W, 1, 1)
        uu = np.arange(H, dtype=np.float64).reshape(1, 1, H, 1)
        kk = np.arange(Wr, dtype=np.float64).reshape(1, 1, 1, Wr)
        ang = 2.0 * np.pi * (uu * hh / H + kk * ww / W)        # (H, W, H, Wr)
        basis_np = np.zeros((H * W, 2 * fpad), dtype=np.float32)
        basis_np[:, :F] = np.cos(ang).reshape(H * W, F)
        basis_np[:, fpad:fpad + F] = -np.sin(ang).reshape(H * W, F)
        basis = jnp.asarray(basis_np, dtype=compute_dtype)
    else:
        w_idx = np.arange(W, dtype=np.float64)[:, None]
        k_idx = np.arange(Wr, dtype=np.float64)[None, :]
        ang_w = 2.0 * np.pi * w_idx * k_idx / W
        cws_np = np.zeros((W, 2 * wp), dtype=np.float32)
        cws_np[:, :Wr] = np.cos(ang_w)
        cws_np[:, wp:wp + Wr] = -np.sin(ang_w)
        cws = jnp.asarray(cws_np, dtype=compute_dtype)
        u_idx = np.arange(H, dtype=np.float64)[:, None]
        h_idx = np.arange(H, dtype=np.float64)[None, :]
        ang_h = 2.0 * np.pi * u_idx * h_idx / H
        # TODO(synk): optional accuracy-gated bf16 stage-2 basis for bf16 inputs.
        chs = jnp.asarray(
            np.concatenate([np.cos(ang_h), np.sin(ang_h)], axis=0),
            dtype=jnp.float32)

    # Advisory cost estimate (matmul flops, sqrt transcendentals, HBM bytes).
    if use_fused:
        flops = 2 * (2 * b_pad) * (H * W) * (2 * fpad)
        transc = 2 * b_pad * fpad
        bytes_acc = 2 * b_pad * H * W * isz + fused_basis_bytes + nb * 8 * fpad * 4
    else:
        flops = (2 * (2 * b_pad * H) * W * (2 * wp)
                 + 2 * (2 * b_pad) * (2 * H) * H * (2 * wp))
        transc = 2 * b_pad * H * wp
        bytes_acc = (2 * b_pad * H * W * isz
                     + (W * 2 * wp + 2 * H * H) * 4 + nb * 8 * wp * 4)
    cost = pl.CostEstimate(flops=int(flops), transcendentals=int(transc),
                           bytes_accessed=int(bytes_acc))
    cparams = pltpu.CompilerParams(dimension_semantics=("parallel",),
                                   vmem_limit_bytes=vmem_limit)

    def _run(single_buffer_consts):
        # Constant bases need no pipelining: request single buffering (saves VMEM).
        const_kw = ({"pipeline_mode": pl.Buffered(1)}
                    if single_buffer_consts else {})
        if use_fused:
            hw = H * W
            kern = functools.partial(_amp_fused_kernel, fpad=fpad)
            grid_spec = pltpu.PrefetchScalarGridSpec(
                num_scalar_prefetch=0,
                grid=(nb,),
                in_specs=[
                    pl.BlockSpec((tb, hw), lambda b: (b, 0)),
                    pl.BlockSpec((tb, hw), lambda b: (b, 0)),
                    pl.BlockSpec((hw, 2 * fpad), lambda b: (0, 0), **const_kw),
                ],
                out_specs=pl.BlockSpec((1, 8, fpad), lambda b: (b, 0, 0)),
            )
            out_shape = jax.ShapeDtypeStruct((nb, 8, fpad), jnp.float32)
            args = (xb.reshape(b_pad, hw), yb.reshape(b_pad, hw), basis)
        else:
            kern = functools.partial(_amp_separable_kernel, tb=tb, H=H, wp=wp)
            grid_spec = pltpu.PrefetchScalarGridSpec(
                num_scalar_prefetch=0,
                grid=(nb,),
                in_specs=[
                    pl.BlockSpec((tb * H, W), lambda b: (b, 0)),
                    pl.BlockSpec((tb * H, W), lambda b: (b, 0)),
                    pl.BlockSpec((W, 2 * wp), lambda b: (0, 0), **const_kw),
                    pl.BlockSpec((2 * H, H), lambda b: (0, 0), **const_kw),
                ],
                out_specs=pl.BlockSpec((1, 8, wp), lambda b: (b, 0, 0)),
                scratch_shapes=[pltpu.VMEM((tb * H, 2 * wp), jnp.float32),
                                pltpu.VMEM((tb * H, 2 * wp), jnp.float32)],
            )
            out_shape = jax.ShapeDtypeStruct((nb, 8, wp), jnp.float32)
            args = (xb.reshape(b_pad * H, W), yb.reshape(b_pad * H, W), cws, chs)
        return pl.pallas_call(kern, out_shape=out_shape, grid_spec=grid_spec,
                              compiler_params=cparams, cost_estimate=cost)(*args)

    try:
        partials = _run(True)
    except Exception:
        # Fallback if this Pallas build rejects single-buffered constant inputs.
        partials = _run(False)

    total = jnp.sum(partials[:, 0, :])
    # Mean over the true (unpadded) rfft2 output: N*C*H*(W//2+1) elements.
    return total / jnp.float32(N * C * H * Wr)


if __name__ == "__main__":
    key = jax.random.PRNGKey(0)
    k1, k2 = jax.random.split(key)
    N, C, H, W = 2, 4, 16, 16
    x = jax.random.normal(k1, (N, C, H, W), dtype=jnp.float32)
    y = jax.random.normal(k2, (N, C, H, W), dtype=jnp.float32)

    # Reference (mirrors torch.fft.rfft2(norm='backward') + L1Loss(mean)).
    ref = jnp.mean(jnp.abs(jnp.abs(jnp.fft.rfft2(x)) - jnp.abs(jnp.fft.rfft2(y))))
    ref = np.asarray(jax.block_until_ready(ref))

    # Fused 2-D rDFT path (the small-image fast path).
    loss = jax.block_until_ready(amp_loss(x, y))
    np.testing.assert_allclose(np.asarray(loss), ref, rtol=2e-4, atol=2e-4)

    # Separable two-stage path (large-image fallback), forced for coverage.
    loss_sep = jax.block_until_ready(amp_loss(x, y, max_fused_basis_bytes=0))
    np.testing.assert_allclose(np.asarray(loss_sep), ref, rtol=2e-4, atol=2e-4)

    print("KERNEL_OK")
</pallas_src>

<mosaic_0001>
module attributes {stable_mosaic.version = 11 : i64} {
  func.func @_amp_fused_kernel(%arg0: i32, %arg1: memref<8x256xf32, #tpu.memory_space<vmem>>, %arg2: memref<8x256xf32, #tpu.memory_space<vmem>>, %arg3: memref<256x512xf32, #tpu.memory_space<vmem>>, %arg4: memref<1x8x256xf32, #tpu.memory_space<vmem>>) attributes {dimension_semantics = [#tpu.dimension_semantics<parallel>], iteration_bounds = array<i64: 1>, scalar_prefetch = 0 : i64, scratch_operands = 0 : i64, tpu.core_type = #tpu.core_type<tc>, window_params = [{transform_indices = @transform_0, window_bounds = array<i64: 8, 256>}, {transform_indices = @transform_1, window_bounds = array<i64: 8, 256>}, {pipeline_mode = #tpu.pipeline_mode<synchronous>, transform_indices = @transform_2, window_bounds = array<i64: 256, 512>}, {transform_indices = @transform_3, window_bounds = array<i64: 1, 8, 256>}]} {
    %c0 = arith.constant 0 : index
    %c0_0 = arith.constant 0 : index
    %0 = vector.load %arg3[%c0, %c0_0] : memref<256x512xf32, #tpu.memory_space<vmem>>, vector<256x512xf32>
    %c0_1 = arith.constant 0 : index
    %c0_2 = arith.constant 0 : index
    %1 = vector.load %arg1[%c0_1, %c0_2] : memref<8x256xf32, #tpu.memory_space<vmem>>, vector<8x256xf32>
    %cst = arith.constant dense<0.000000e+00> : vector<8x512xf32>
    %2 = tpu.matmul %1, %0, %cst {dimension_numbers = #tpu.dot_dimension_numbers<[1], [0], [0], [1], [0, 0, 1, 1], [], []>} : vector<8x256xf32>, vector<256x512xf32>, vector<8x512xf32> -> vector<8x512xf32>
    %c0_3 = arith.constant 0 : index
    %c0_4 = arith.constant 0 : index
    %3 = vector.load %arg2[%c0_3, %c0_4] : memref<8x256xf32, #tpu.memory_space<vmem>>, vector<8x256xf32>
    %cst_5 = arith.constant dense<0.000000e+00> : vector<8x512xf32>
    %4 = tpu.matmul %3, %0, %cst_5 {dimension_numbers = #tpu.dot_dimension_numbers<[1], [0], [0], [1], [0, 0, 1, 1], [], []>} : vector<8x256xf32>, vector<256x512xf32>, vector<8x512xf32> -> vector<8x512xf32>
    %5 = vector.extract_strided_slice %2 {offsets = [0, 0], sizes = [8, 256], strides = [1, 1]} : vector<8x512xf32> to vector<8x256xf32>
    %6 = vector.extract_strided_slice %2 {offsets = [0, 256], sizes = [8, 256], strides = [1, 1]} : vector<8x512xf32> to vector<8x256xf32>
    %7 = vector.extract_strided_slice %4 {offsets = [0, 0], sizes = [8, 256], strides = [1, 1]} : vector<8x512xf32> to vector<8x256xf32>
    %8 = vector.extract_strided_slice %4 {offsets = [0, 256], sizes = [8, 256], strides = [1, 1]} : vector<8x512xf32> to vector<8x256xf32>
    %9 = arith.mulf %5, %5 : vector<8x256xf32>
    %10 = arith.mulf %6, %6 : vector<8x256xf32>
    %11 = arith.addf %9, %10 : vector<8x256xf32>
    %12 = math.sqrt %11 : vector<8x256xf32>
    %13 = arith.mulf %7, %7 : vector<8x256xf32>
    %14 = arith.mulf %8, %8 : vector<8x256xf32>
    %15 = arith.addf %13, %14 : vector<8x256xf32>
    %16 = math.sqrt %15 : vector<8x256xf32>
    %17 = arith.subf %12, %16 : vector<8x256xf32>
    %18 = math.absf %17 : vector<8x256xf32>
    %cst_6 = arith.constant dense<0.000000e+00> : vector<256xf32>
    %19 = vector.multi_reduction <add>, %18, %cst_6 [0] : vector<8x256xf32> to vector<256xf32>
    %20 = vector.shape_cast %19 : vector<256xf32> to vector<1x256xf32>
    %21 = vector.shape_cast %20 : vector<1x256xf32> to vector<1x1x256xf32>
    %22 = vector.shape_cast %21 : vector<1x1x256xf32> to vector<1x1x256xf32>
    %23 = vector.broadcast %22 : vector<1x1x256xf32> to vector<1x8x256xf32>
    %c0_7 = arith.constant 0 : index
    %c0_8 = arith.constant 0 : index
    %c0_9 = arith.constant 0 : index
    %24 = vector.load %arg4[%c0_7, %c0_8, %c0_9] : memref<1x8x256xf32, #tpu.memory_space<vmem>>, vector<1x8x256xf32>
    tpu.vector_store %arg4[%c0_7, %c0_8, %c0_9], %23 {strides = array<i32>} : memref<1x8x256xf32, #tpu.memory_space<vmem>>, vector<1x8x256xf32>,
    return
  }
  func.func @transform_0(%arg0: i32) -> (i32, i32) {
    %c0_i32 = arith.constant 0 : i32
    %c0_i32_0 = arith.constant 0 : i32
    return %arg0, %c0_i32 : i32, i32
  }
  func.func @transform_1(%arg0: i32) -> (i32, i32) {
    %c0_i32 = arith.constant 0 : i32
    %c0_i32_0 = arith.constant 0 : i32
    return %arg0, %c0_i32 : i32, i32
  }
  func.func @transform_2(%arg0: i32) -> (i32, i32) {
    %c0_i32 = arith.constant 0 : i32
    %c0_i32_0 = arith.constant 0 : i32
    %c0_i32_1 = arith.constant 0 : i32
    return %c0_i32, %c0_i32_0 : i32, i32
  }
  func.func @transform_3(%arg0: i32) -> (i32, i32, i32) {
    %c0_i32 = arith.constant 0 : i32
    %c0_i32_0 = arith.constant 0 : i32
    %c0_i32_1 = arith.constant 0 : i32
    return %arg0, %c0_i32, %c0_i32_0 : i32, i32, i32
  }
}

module attributes {stable_mosaic.version = 11 : i64} {
  func.func @_amp_fused_kernel(%arg0: i32, %arg1: memref<8x256xf32, #tpu.memory_space<vmem>>, %arg2: memref<8x256xf32, #tpu.memory_space<vmem>>, %arg3: memref<256x512xf32, #tpu.memory_space<vmem>>, %arg4: memref<1x8x256xf32, #tpu.memory_space<vmem>>) attributes {dimension_semantics = [#tpu.dimension_semantics<parallel>], iteration_bounds = array<i64: 1>, scalar_prefetch = 0 : i64, scratch_operands = 0 : i64, tpu.core_type = #tpu.core_type<tc>, window_params = [{transform_indices = @transform_0, window_bounds = array<i64: 8, 256>}, {transform_indices = @transform_1, window_bounds = array<i64: 8, 256>}, {pipeline_mode = #tpu.pipeline_mode<synchronous>, transform_indices = @transform_2, window_bounds = array<i64: 256, 512>}, {transform_indices = @transform_3, window_bounds = array<i64: 1, 8, 256>}]} {
    %c0 = arith.constant 0 : index
    %c0_0 = arith.constant 0 : index
    %0 = vector.load %arg3[%c0, %c0_0] : memref<256x512xf32, #tpu.memory_space<vmem>>, vector<256x512xf32>
    %c0_1 = arith.constant 0 : index
    %c0_2 = arith.constant 0 : index
    %1 = vector.load %arg1[%c0_1, %c0_2] : memref<8x256xf32, #tpu.memory_space<vmem>>, vector<8x256xf32>
    %cst = arith.constant dense<0.000000e+00> : vector<8x512xf32>
    %2 = tpu.matmul %1, %0, %cst {dimension_numbers = #tpu.dot_dimension_numbers<[1], [0], [0], [1], [0, 0, 1, 1], [], []>} : vector<8x256xf32>, vector<256x512xf32>, vector<8x512xf32> -> vector<8x512xf32>
    %c0_3 = arith.constant 0 : index
    %c0_4 = arith.constant 0 : index
    %3 = vector.load %arg2[%c0_3, %c0_4] : memref<8x256xf32, #tpu.memory_space<vmem>>, vector<8x256xf32>
    %cst_5 = arith.constant dense<0.000000e+00> : vector<8x512xf32>
    %4 = tpu.matmul %3, %0, %cst_5 {dimension_numbers = #tpu.dot_dimension_numbers<[1], [0], [0], [1], [0, 0, 1, 1], [], []>} : vector<8x256xf32>, vector<256x512xf32>, vector<8x512xf32> -> vector<8x512xf32>
    %5 = vector.extract_strided_slice %2 {offsets = [0, 0], sizes = [8, 256], strides = [1, 1]} : vector<8x512xf32> to vector<8x256xf32>
    %6 = vector.extract_strided_slice %2 {offsets = [0, 256], sizes = [8, 256], strides = [1, 1]} : vector<8x512xf32> to vector<8x256xf32>
    %7 = vector.extract_strided_slice %4 {offsets = [0, 0], sizes = [8, 256], strides = [1, 1]} : vector<8x512xf32> to vector<8x256xf32>
    %8 = vector.extract_strided_slice %4 {offsets = [0, 256], sizes = [8, 256], strides = [1, 1]} : vector<8x512xf32> to vector<8x256xf32>
    %9 = arith.mulf %5, %5 : vector<8x256xf32>
    %10 = arith.mulf %6, %6 : vector<8x256xf32>
    %11 = arith.addf %9, %10 : vector<8x256xf32>
    %12 = math.sqrt %11 : vector<8x256xf32>
    %13 = arith.mulf %7, %7 : vector<8x256xf32>
    %14 = arith.mulf %8, %8 : vector<8x256xf32>
    %15 = arith.addf %13, %14 : vector<8x256xf32>
    %16 = math.sqrt %15 : vector<8x256xf32>
    %17 = arith.subf %12, %16 : vector<8x256xf32>
    %18 = math.absf %17 : vector<8x256xf32>
    %cst_6 = arith.constant dense<0.000000e+00> : vector<256xf32>
    %19 = vector.multi_reduction <add>, %18, %cst_6 [0] : vector<8x256xf32> to vector<256xf32>
    %20 = vector.shape_cast %19 : vector<256xf32> to vector<1x256xf32>
    %21 = vector.shape_cast %20 : vector<1x256xf32> to vector<1x1x256xf32>
    %22 = vector.shape_cast %21 : vector<1x1x256xf32> to vector<1x1x256xf32>
    %23 = vector.broadcast %22 : vector<1x1x256xf32> to vector<1x8x256xf32>
    %c0_7 = arith.constant 0 : index
    %c0_8 = arith.constant 0 : index
    %c0_9 = arith.constant 0 : index
    %24 = vector.load %arg4[%c0_7, %c0_8, %c0_9] : memref<1x8x256xf32, #tpu.memory_space<vmem>>, vector<1x8x256xf32>
    tpu.vector_store %arg4[%c0_7, %c0_8, %c0_9], %23 {strides = array<i32>} : memref<1x8x256xf32, #tpu.memory_space<vmem>>, vector<1x8x256xf32>,
    return
  }
  func.func @transform_0(%arg0: i32) -> (i32, i32) {
    %c0_i32 = arith.constant 0 : i32
    %c0_i32_0 = arith.constant 0 : i32
    return %arg0, %c0_i32 : i32, i32
  }
  func.func @transform_1(%arg0: i32) -> (i32, i32) {
    %c0_i32 = arith.constant 0 : i32
    %c0_i32_0 = arith.constant 0 : i32
    return %arg0, %c0_i32 : i32, i32
  }
  func.func @transform_2(%arg0: i32) -> (i32, i32) {
    %c0_i32 = arith.constant 0 : i32
    %c0_i32_0 = arith.constant 0 : i32
    %c0_i32_1 = arith.constant 0 : i32
    return %c0_i32, %c0_i32_0 : i32, i32
  }
  func.func @transform_3(%arg0: i32) -> (i32, i32, i32) {
    %c0_i32 = arith.constant 0 : i32
    %c0_i32_0 = arith.constant 0 : i32
    %c0_i32_1 = arith.constant 0 : i32
    return %arg0, %c0_i32, %c0_i32_0 : i32, i32, i32
  }
}

</mosaic_0001>

<llo_original>
// kernel: tpu_custom_call.1
$region0: #{tpu_custom_call.1}
  #allocation0 [shape = 'u32[]', space=smem, size = 0x4, offset = 0x4, fixed_abs, tag = 'smem constant byte address 0x4 - core index']
  #allocation1 [shape = 'u32[144,128]{1,0:T(1,128)}', space=vmem, size = 0x12000, scoped, tag = 'internal scratch']
  %s0 = inlined_call_operand.hbm [shape: f32[8,256], index: 0, kind: input, shape index: {}]
  %s1 = inlined_call_operand.hbm [shape: f32[8,256], index: 1, kind: input, shape index: {}]
  %s2 = inlined_call_operand.hbm [shape: f32[256,512], index: 2, kind: input, shape index: {}]
  %s3 = inlined_call_operand.hbm [shape: f32[1,8,256], index: 3, kind: output, shape index: {}]
  %s4 = sld [smem:[#allocation0]]
  $region34: #{tpu_custom_call.1} parent=0
    _
  %s6 = ssub.s32 1, %s4
  %s7 = scalar_select 0, %s6, %s4
  $region1: #{tpu_custom_call.1} parent=0
    #allocation2 [shape = 'u8[8192]{0}', space=vmem, size = 0x2000, scoped, tag = 'input window, operand 0, single buffered']
    #allocation3 [shape = 's32[1]{0}', space=sflag, size = 0x4, scoped, tag = 'scoped memory for tpu_custom_call.1']
    #allocation4 [shape = 's32[1]{0}', space=sflag, size = 0x4, scoped, tag = 'scoped memory for tpu_custom_call.1']
    #allocation5 [shape = 'u8[8192]{0}', space=vmem, size = 0x2000, scoped, tag = 'input window, operand 1, single buffered']
    #allocation6 [shape = 's32[1]{0}', space=sflag, size = 0x4, scoped, tag = 'scoped memory for tpu_custom_call.1']
    #allocation7 [shape = 'u8[524288]{0}', space=vmem, size = 0x80000, scoped, tag = 'input window, operand 2, single buffered']
    #allocation8 [shape = 'u8[8192]{0}', space=vmem, size = 0x2000, scoped, tag = 'output window, operand 0, single buffered']
    %8 = vsyncpa [#allocation3], 0
    %9 = vsyncpa [#allocation6], 0
    %10 = vsyncpa [#allocation4], 0
    // Predicated region
    $region2: #{tpu_custom_call.1} parent=1 // pred_check
      _
    $region3: #{tpu_custom_call.1} parent=1 // pred_check_branch
      %12 = sbr.rel (0) target = $region5
    $region4: #{tpu_custom_call.1} parent=1 // pred_region
      %s14 = ssub.s32 256, 256
      %15 = vsyncadd [#allocation3], %s14
      %s17 = sshll.u32 [#allocation2], 4
      %s18 = int_to_ptr.vmem [resolvable:$true] %s17
      %20 = dma.hbm_to_vmem [thread:$0]  %s0, 256, %s18, [#allocation3]
    $region5: #{tpu_custom_call.1} parent=1 // pred_fallthru
      _
    // Predicated region
    $region6: #{tpu_custom_call.1} parent=1 // pred_check
      _
    $region7: #{tpu_custom_call.1} parent=1 // pred_check_branch
      %22 = sbr.rel (0) target = $region9
    $region8: #{tpu_custom_call.1} parent=1 // pred_region
      %s24 = ssub.s32 256, 256
      %25 = vsyncadd [#allocation6], %s24
      %s27 = sshll.u32 [#allocation5], 4
      %s28 = int_to_ptr.vmem [resolvable:$true] %s27
      %30 = dma.hbm_to_vmem [thread:$0]  %s1, 256, %s28, [#allocation6]
    $region9: #{tpu_custom_call.1} parent=1 // pred_fallthru
      _
    // Predicated region
    $region10: #{tpu_custom_call.1} parent=1 // pred_check
      _
    $region11: #{tpu_custom_call.1} parent=1 // pred_check_branch
      %32 = sbr.rel (0) target = $region13
    $region12: #{tpu_custom_call.1} parent=1 // pred_region
      %s34 = ssub.s32 16384, 16384
      %35 = vsyncadd [#allocation6], %s34
      %s36 = sshll.u32 [#allocation7], 4
      %s37 = int_to_ptr.vmem [resolvable:$true] %s36
      %42 = dma.hbm_to_vmem [thread:$0]  %s2, 16384, %s37, [#allocation6], 512, 512, 32
    $region13: #{tpu_custom_call.1} parent=1 // pred_fallthru
      _
    // Predicated region
    $region14: #{tpu_custom_call.1} parent=1 // pred_check
      _
    $region15: #{tpu_custom_call.1} parent=1 // pred_check_branch
      %44 = sbr.rel (0) target = $region17
    $region16: #{tpu_custom_call.1} parent=1 // pred_region
      %45 = dma.done [#allocation3], 256
    $region17: #{tpu_custom_call.1} parent=1 // pred_fallthru
      _
    // Predicated region
    $region18: #{tpu_custom_call.1} parent=1 // pred_check
      _
    $region19: #{tpu_custom_call.1} parent=1 // pred_check_branch
      %47 = sbr.rel (0) target = $region21
    $region20: #{tpu_custom_call.1} parent=1 // pred_region
      %48 = dma.done [#allocation6], 256
    $region21: #{tpu_custom_call.1} parent=1 // pred_fallthru
      _
    // Predicated region
    $region22: #{tpu_custom_call.1} parent=1 // pred_check
      _
    $region23: #{tpu_custom_call.1} parent=1 // pred_check_branch
      %50 = sbr.rel (0) target = $region25
    $region24: #{tpu_custom_call.1} parent=1 // pred_region
      %51 = dma.done [#allocation6], 16384
    $region25: #{tpu_custom_call.1} parent=1 // pred_fallthru
      _
    %v52 = vld [vmem:[#allocation7] sm:$0xff]
    %v53 = vld [vmem:[#allocation7 + $0x8] sm:$0xff]
    %v54 = vld [vmem:[#allocation7 + $0x10] sm:$0xff]
    %v55 = vld [vmem:[#allocation7 + $0x18] sm:$0xff]
    %v56 = vld [vmem:[#allocation7 + $0x20] sm:$0xff]
    %v57 = vld [vmem:[#allocation7 + $0x28] sm:$0xff]
    %v58 = vld [vmem:[#allocation7 + $0x30] sm:$0xff]
    %v59 = vld [vmem:[#allocation7 + $0x38] sm:$0xff]
    %v60 = vld [vmem:[#allocation7 + $0x40] sm:$0xff]
    %v61 = vld [vmem:[#allocation7 + $0x48] sm:$0xff]
    %v62 = vld [vmem:[#allocation7 + $0x50] sm:$0xff]
    %v63 = vld [vmem:[#allocation7 + $0x58] sm:$0xff]
    %v64 = vld [vmem:[#allocation7 + $0x60] sm:$0xff]
    %v65 = vld [vmem:[#allocation7 + $0x68] sm:$0xff]
    %v66 = vld [vmem:[#allocation7 + $0x70] sm:$0xff]
    %v67 = vld [vmem:[#allocation7 + $0x78] sm:$0xff]
    %v68 = vld [vmem:[#allocation7 + $0x80] sm:$0xff]
    %v69 = vld [vmem:[#allocation7 + $0x88] sm:$0xff]
    %v70 = vld [vmem:[#allocation7 + $0x90] sm:$0xff]
    %v71 = vld [vmem:[#allocation7 + $0x98] sm:$0xff]
    %v72 = vld [vmem:[#allocation7 + $0xa0] sm:$0xff]
    %v73 = vld [vmem:[#allocation7 + $0xa8] sm:$0xff]
    %v74 = vld [vmem:[#allocation7 + $0xb0] sm:$0xff]
    %v75 = vld [vmem:[#allocation7 + $0xb8] sm:$0xff]
    %v76 = vld [vmem:[#allocation7 + $0xc0] sm:$0xff]
    %v77 = vld [vmem:[#allocation7 + $0xc8] sm:$0xff]
    %v78 = vld [vmem:[#allocation7 + $0xd0] sm:$0xff]
    %v79 = vld [vmem:[#allocation7 + $0xd8] sm:$0xff]
    %v80 = vld [vmem:[#allocation7 + $0xe0] sm:$0xff]
    %v81 = vld [vmem:[#allocation7 + $0xe8] sm:$0xff]
    %v82 = vld [vmem:[#allocation7 + $0xf0] sm:$0xff]
    %v83 = vld [vmem:[#allocation7 + $0xf8] sm:$0xff]
    %v84 = vld [vmem:[#allocation7 + $0x100] sm:$0xff]
    %v85 = vld [vmem:[#allocation7 + $0x108] sm:$0xff]
    %v86 = vld [vmem:[#allocation7 + $0x110] sm:$0xff]
    %v87 = vld [vmem:[#allocation7 + $0x118] sm:$0xff]
    %v88 = vld [vmem:[#allocation7 + $0x120] sm:$0xff]
    %v89 = vld [vmem:[#allocation7 + $0x128] sm:$0xff]
    %v90 = vld [vmem:[#allocation7 + $0x130] sm:$0xff]
    %v91 = vld [vmem:[#allocation7 + $0x138] sm:$0xff]
    %v92 = vld [vmem:[#allocation7 + $0x140] sm:$0xff]
    %v93 = vld [vmem:[#allocation7 + $0x148] sm:$0xff]
    %v94 = vld [vmem:[#allocation7 + $0x150] sm:$0xff]
    %v95 = vld [vmem:[#allocation7 + $0x158] sm:$0xff]
    %v96 = vld [vmem:[#allocation7 + $0x160] sm:$0xff]
    %v97 = vld [vmem:[#allocation7 + $0x168] sm:$0xff]
    %v98 = vld [vmem:[#allocation7 + $0x170] sm:$0xff]
    %v99 = vld [vmem:[#allocation7 + $0x178] sm:$0xff]
    %v100 = vld [vmem:[#allocation7 + $0x180] sm:$0xff]
    %v101 = vld [vmem:[#allocation7 + $0x188] sm:$0xff]
    %v102 = vld [vmem:[#allocation7 + $0x190] sm:$0xff]
    %v103 = vld [vmem:[#allocation7 + $0x198] sm:$0xff]
    %v104 = vld [vmem:[#allocation7 + $0x1a0] sm:$0xff]
    %v105 = vld [vmem:[#allocation7 + $0x1a8] sm:$0xff]
    %v106 = vld [vmem:[#allocation7 + $0x1b0] sm:$0xff]
    %v107 = vld [vmem:[#allocation7 + $0x1b8] sm:$0xff]
    %v108 = vld [vmem:[#allocation7 + $0x1c0] sm:$0xff]
    %v109 = vld [vmem:[#allocation7 + $0x1c8] sm:$0xff]
    %v110 = vld [vmem:[#allocation7 + $0x1d0] sm:$0xff]
    %v111 = vld [vmem:[#allocation7 + $0x1d8] sm:$0xff]
    %v112 = vld [vmem:[#allocation7 + $0x1e0] sm:$0xff]
    %v113 = vld [vmem:[#allocation7 + $0x1e8] sm:$0xff]
    %v114 = vld [vmem:[#allocation7 + $0x1f0] sm:$0xff]
    %v115 = vld [vmem:[#allocation7 + $0x1f8] sm:$0xff]
    %v116 = vld [vmem:[#allocation7 + $0x200] sm:$0xff]
    %v117 = vld [vmem:[#allocation7 + $0x208] sm:$0xff]
    %v118 = vld [vmem:[#allocation7 + $0x210] sm:$0xff]
    %v119 = vld [vmem:[#allocation7 + $0x218] sm:$0xff]
    %v120 = vld [vmem:[#allocation7 + $0x220] sm:$0xff]
    %v121 = vld [vmem:[#allocation7 + $0x228] sm:$0xff]
    %v122 = vld [vmem:[#allocation7 + $0x230] sm:$0xff]
    %v123 = vld [vmem:[#allocation7 + $0x238] sm:$0xff]
    %v124 = vld [vmem:[#allocation7 + $0x240] sm:$0xff]
    %v125 = vld [vmem:[#allocation7 + $0x248] sm:$0xff]
    %v126 = vld [vmem:[#allocation7 + $0x250] sm:$0xff]
    %v127 = vld [vmem:[#allocation7 + $0x258] sm:$0xff]
    %v128 = vld [vmem:[#allocation7 + $0x260] sm:$0xff]
    %v129 = vld [vmem:[#allocation7 + $0x268] sm:$0xff]
    %v130 = vld [vmem:[#allocation7 + $0x270] sm:$0xff]
    %v131 = vld [vmem:[#allocation7 + $0x278] sm:$0xff]
    %v132 = vld [vmem:[#allocation7 + $0x280] sm:$0xff]
    %v133 = vld [vmem:[#allocation7 + $0x288] sm:$0xff]
    %v134 = vld [vmem:[#allocation7 + $0x290] sm:$0xff]
    %v135 = vld [vmem:[#allocation7 + $0x298] sm:$0xff]
    %v136 = vld [vmem:[#allocation7 + $0x2a0] sm:$0xff]
    %v137 = vld [vmem:[#allocation7 + $0x2a8] sm:$0xff]
    %v138 = vld [vmem:[#allocation7 + $0x2b0] sm:$0xff]
    %v139 = vld [vmem:[#allocation7 + $0x2b8] sm:$0xff]
    %v140 = vld [vmem:[#allocation7 + $0x2c0] sm:$0xff]
    %v141 = vld [vmem:[#allocation7 + $0x2c8] sm:$0xff]
    %v142 = vld [vmem:[#allocation7 + $0x2d0] sm:$0xff]
    %v143 = vld [vmem:[#allocation7 + $0x2d8] sm:$0xff]
    %v144 = vld [vmem:[#allocation7 + $0x2e0] sm:$0xff]
    %v145 = vld [vmem:[#allocation7 + $0x2e8] sm:$0xff]
    %v146 = vld [vmem:[#allocation7 + $0x2f0] sm:$0xff]
    %v147 = vld [vmem:[#allocation7 + $0x2f8] sm:$0xff]
    %v148 = vld [vmem:[#allocation7 + $0x300] sm:$0xff]
    %v149 = vld [vmem:[#allocation7 + $0x308] sm:$0xff]
    %v150 = vld [vmem:[#allocation7 + $0x310] sm:$0xff]
    %v151 = vld [vmem:[#allocation7 + $0x318] sm:$0xff]
    %v152 = vld [vmem:[#allocation7 + $0x320] sm:$0xff]
    %v153 = vld [vmem:[#allocation7 + $0x328] sm:$0xff]
    %v154 = vld [vmem:[#allocation7 + $0x330] sm:$0xff]
    %v155 = vld [vmem:[#allocation7 + $0x338] sm:$0xff]
    %v156 = vld [vmem:[#allocation7 + $0x340] sm:$0xff]
    %v157 = vld [vmem:[#allocation7 + $0x348] sm:$0xff]
    %v158 = vld [vmem:[#allocation7 + $0x350] sm:$0xff]
    %v159 = vld [vmem:[#allocation7 + $0x358] sm:$0xff]
    %v160 = vld [vmem:[#allocation7 + $0x360] sm:$0xff]
    %v161 = vld [vmem:[#allocation7 + $0x368] sm:$0xff]
    %v162 = vld [vmem:[#allocation7 + $0x370] sm:$0xff]
    %v163 = vld [vmem:[#allocation7 + $0x378] sm:$0xff]
    %v164 = vld [vmem:[#allocation7 + $0x380] sm:$0xff]
    %v165 = vld [vmem:[#allocation7 + $0x388] sm:$0xff]
    %v166 = vld [vmem:[#allocation7 + $0x390] sm:$0xff]
    %v167 = vld [vmem:[#allocation7 + $0x398] sm:$0xff]
    %v168 = vld [vmem:[#allocation7 + $0x3a0] sm:$0xff]
    %v169 = vld [vmem:[#allocation7 + $0x3a8] sm:$0xff]
    %v170 = vld [vmem:[#allocation7 + $0x3b0] sm:$0xff]
    %v171 = vld [vmem:[#allocation7 + $0x3b8] sm:$0xff]
    %v172 = vld [vmem:[#allocation7 + $0x3c0] sm:$0xff]
    %v173 = vld [vmem:[#allocation7 + $0x3c8] sm:$0xff]
    %v174 = vld [vmem:[#allocation7 + $0x3d0] sm:$0xff]
    %v175 = vld [vmem:[#allocation7 + $0x3d8] sm:$0xff]
    %v176 = vld [vmem:[#allocation7 + $0x3e0] sm:$0xff]
    %v177 = vld [vmem:[#allocation7 + $0x3e8] sm:$0xff]
    %v178 = vld [vmem:[#allocation7 + $0x3f0] sm:$0xff]
    %v179 = vld [vmem:[#allocation7 + $0x3f8] sm:$0xff]
    %v180 = vld [vmem:[#allocation2] sm:$0xff]
    %v181 = vld [vmem:[#allocation2 + $0x8] sm:$0xff]
    %182 = vmatprep.subr.mxu0 %v113
    %183 = vmatpush1.msra.mxu0 %v112
    %184 = vmatprep.subr.mxu0 %v109
    %185 = vmatpush1.msra.mxu0 %v108
    %186 = vmatprep.subr.mxu0 %v105
    %187 = vmatpush1.msra.mxu0 %v104
    %188 = vmatprep.subr.mxu0 %v101
    %189 = vmatpush1.msra.mxu0 %v100
    %190 = vmatprep.subr.mxu0 %v97
    %191 = vmatpush1.msra.mxu0 %v96
    %192 = vmatprep.subr.mxu0 %v93
    %193 = vmatpush1.msra.mxu0 %v92
    %194 = vmatprep.subr.mxu0 %v89
    %195 = vmatpush1.msra.mxu0 %v88
    %196 = vmatprep.subr.mxu0 %v85
    %197 = vmatpush1.msra.mxu0 %v84
    %198 = vmatprep.subr.mxu0 %v81
    %199 = vmatpush1.msra.mxu0 %v80
    %200 = vmatprep.subr.mxu0 %v77
    %201 = vmatpush1.msra.mxu0 %v76
    %202 = vmatprep.subr.mxu0 %v73
    %203 = vmatpush1.msra.mxu0 %v72
    %204 = vmatprep.subr.mxu0 %v69
    %205 = vmatpush1.msra.mxu0 %v68
    %206 = vmatprep.subr.mxu0 %v65
    %207 = vmatpush1.msra.mxu0 %v64
    %208 = vmatprep.subr.mxu0 %v61
    %209 = vmatpush1.msra.mxu0 %v60
    %210 = vmatprep.subr.mxu0 %v57
    %211 = vmatpush1.msra.mxu0 %v56
    %212 = vmatprep.subr.mxu0 %v53
    %213 = vmatpush1.msra.mxu0 %v52
    %214 = vmatprep.subr.mxu0 %v177
    %215 = vmatpush2.msra.mxu0 %v176
    %216 = vmatprep.subr.mxu0 %v173
    %217 = vmatpush2.msra.mxu0 %v172
    %218 = vmatprep.subr.mxu0 %v169
    %219 = vmatpush2.msra.mxu0 %v168
    %220 = vmatprep.subr.mxu0 %v165
    %221 = vmatpush2.msra.mxu0 %v164
    %222 = vmatprep.subr.mxu0 %v161
    %223 = vmatpush2.msra.mxu0 %v160
    %224 = vmatprep.subr.mxu0 %v157
    %225 = vmatpush2.msra.mxu0 %v156
    %226 = vmatprep.subr.mxu0 %v153
    %227 = vmatpush2.msra.mxu0 %v152
    %228 = vmatprep.subr.mxu0 %v149
    %229 = vmatpush2.msra.mxu0 %v148
    %230 = vmatprep.subr.mxu0 %v145
    %231 = vmatpush2.msra.mxu0 %v144
    %232 = vmatprep.subr.mxu0 %v141
    %233 = vmatpush2.msra.mxu0 %v140
    %234 = vmatprep.subr.mxu0 %v137
    %235 = vmatpush2.msra.mxu0 %v136
    %236 = vmatprep.subr.mxu0 %v133
    %237 = vmatpush2.msra.mxu0 %v132
    %238 = vmatprep.subr.mxu0 %v129
    %239 = vmatpush2.msra.mxu0 %v128
    %240 = vmatprep.subr.mxu0 %v125
    %241 = vmatpush2.msra.mxu0 %v124
    %242 = vmatprep.subr.mxu0 %v121
    %243 = vmatpush2.msra.mxu0 %v120
    %244 = vmatprep.subr.mxu0 %v117
    %245 = vmatpush2.msra.mxu0 %v116
    %246 = vmatprep.mubr.f32.mxu0 %v181
    %247 = vmatmul.mubr.f32.gmra.mxu0 %v180
    %v248 = vpop.f32.mrf.mxu0
    %v249 = vadd.f32 0.0, %v248
    %v250 = vpop.f32.mrf.mxu0
    %v251 = vadd.f32 0.0, %v250
    %252 = vdwg.mxu0
    %253 = vmatprep.subr.mxu0 %v115
    %254 = vmatpush1.msra.mxu0 %v114
    %255 = vmatprep.subr.mxu0 %v111
    %256 = vmatpush1.msra.mxu0 %v110
    %257 = vmatprep.subr.mxu0 %v107
    %258 = vmatpush1.msra.mxu0 %v106
    %259 = vmatprep.subr.mxu0 %v103
    %260 = vmatpush1.msra.mxu0 %v102
    %261 = vmatprep.subr.mxu0 %v99
    %262 = vmatpush1.msra.mxu0 %v98
    %263 = vmatprep.subr.mxu0 %v95
    %264 = vmatpush1.msra.mxu0 %v94
    %265 = vmatprep.subr.mxu0 %v91
    %266 = vmatpush1.msra.mxu0 %v90
    %267 = vmatprep.subr.mxu0 %v87
    %268 = vmatpush1.msra.mxu0 %v86
    %269 = vmatprep.subr.mxu0 %v83
    %270 = vmatpush1.msra.mxu0 %v82
    %271 = vmatprep.subr.mxu0 %v79
    %272 = vmatpush1.msra.mxu0 %v78
    %273 = vmatprep.subr.mxu0 %v75
    %274 = vmatpush1.msra.mxu0 %v74
    %275 = vmatprep.subr.mxu0 %v71
    %276 = vmatpush1.msra.mxu0 %v70
    %277 = vmatprep.subr.mxu0 %v67
    %278 = vmatpush1.msra.mxu0 %v66
    %279 = vmatprep.subr.mxu0 %v63
    %280 = vmatpush1.msra.mxu0 %v62
    %281 = vmatprep.subr.mxu0 %v59
    %282 = vmatpush1.msra.mxu0 %v58
    %283 = vmatprep.subr.mxu0 %v55
    %284 = vmatpush1.msra.mxu0 %v54
    %285 = vmatprep.subr.mxu0 %v179
    %286 = vmatpush2.msra.mxu0 %v178
    %287 = vmatprep.subr.mxu0 %v175
    %288 = vmatpush2.msra.mxu0 %v174
    %289 = vmatprep.subr.mxu0 %v171
    %290 = vmatpush2.msra.mxu0 %v170
    %291 = vmatprep.subr.mxu0 %v167
    %292 = vmatpush2.msra.mxu0 %v166
    %293 = vmatprep.subr.mxu0 %v163
    %294 = vmatpush2.msra.mxu0 %v162
    %295 = vmatprep.subr.mxu0 %v159
    %296 = vmatpush2.msra.mxu0 %v158
    %297 = vmatprep.subr.mxu0 %v155
    %298 = vmatpush2.msra.mxu0 %v154
    %299 = vmatprep.subr.mxu0 %v151
    %300 = vmatpush2.msra.mxu0 %v150
    %301 = vmatprep.subr.mxu0 %v147
    %302 = vmatpush2.msra.mxu0 %v146
    %303 = vmatprep.subr.mxu0 %v143
    %304 = vmatpush2.msra.mxu0 %v142
    %305 = vmatprep.subr.mxu0 %v139
    %306 = vmatpush2.msra.mxu0 %v138
    %307 = vmatprep.subr.mxu0 %v135
    %308 = vmatpush2.msra.mxu0 %v134
    %309 = vmatprep.subr.mxu0 %v131
    %310 = vmatpush2.msra.mxu0 %v130
    %311 = vmatprep.subr.mxu0 %v127
    %312 = vmatpush2.msra.mxu0 %v126
    %313 = vmatprep.subr.mxu0 %v123
    %314 = vmatpush2.msra.mxu0 %v122
    %315 = vmatprep.subr.mxu0 %v119
    %316 = vmatpush2.msra.mxu0 %v118
    %317 = vmatprep.mubr.f32.mxu0 %v181
    %318 = vmatmul.mubr.f32.gmra.mxu0 %v180
    %v319 = vpop.f32.mrf.mxu0
    %v320 = vadd.f32 0.0, %v319
    %v321 = vpop.f32.mrf.mxu0
    %v322 = vadd.f32 0.0, %v321
    %323 = vdwg.mxu0
    %v324 = vld [vmem:[#allocation5] sm:$0xff]
    %v325 = vld [vmem:[#allocation5 + $0x8] sm:$0xff]
    %326 = vmatprep.subr.mxu0 %v113
    %327 = vmatpush1.msra.mxu0 %v112
    %328 = vmatprep.subr.mxu0 %v109
    %329 = vmatpush1.msra.mxu0 %v108
    %330 = vmatprep.subr.mxu0 %v105
    %331 = vmatpush1.msra.mxu0 %v104
    %332 = vmatprep.subr.mxu0 %v101
    %333 = vmatpush1.msra.mxu0 %v100
    %334 = vmatprep.subr.mxu0 %v97
    %335 = vmatpush1.msra.mxu0 %v96
    %336 = vmatprep.subr.mxu0 %v93
    %337 = vmatpush1.msra.mxu0 %v92
    %338 = vmatprep.subr.mxu0 %v89
    %339 = vmatpush1.msra.mxu0 %v88
    %340 = vmatprep.subr.mxu0 %v85
    %341 = vmatpush1.msra.mxu0 %v84
    %342 = vmatprep.subr.mxu0 %v81
    %343 = vmatpush1.msra.mxu0 %v80
    %344 = vmatprep.subr.mxu0 %v77
    %345 = vmatpush1.msra.mxu0 %v76
    %346 = vmatprep.subr.mxu0 %v73
    %347 = vmatpush1.msra.mxu0 %v72
    %348 = vmatprep.subr.mxu0 %v69
    %349 = vmatpush1.msra.mxu0 %v68
    %350 = vmatprep.subr.mxu0 %v65
    %351 = vmatpush1.msra.mxu0 %v64
    %352 = vmatprep.subr.mxu0 %v61
    %353 = vmatpush1.msra.mxu0 %v60
    %354 = vmatprep.subr.mxu0 %v57
    %355 = vmatpush1.msra.mxu0 %v56
    %356 = vmatprep.subr.mxu0 %v53
    %357 = vmatpush1.msra.mxu0 %v52
    %358 = vmatprep.subr.mxu0 %v177
    %359 = vmatpush2.msra.mxu0 %v176
    %360 = vmatprep.subr.mxu0 %v173
    %361 = vmatpush2.msra.mxu0 %v172
    %362 = vmatprep.subr.mxu0 %v169
    %363 = vmatpush2.msra.mxu0 %v168
    %364 = vmatprep.subr.mxu0 %v165
    %365 = vmatpush2.msra.mxu0 %v164
    %366 = vmatprep.subr.mxu0 %v161
    %367 = vmatpush2.msra.mxu0 %v160
    %368 = vmatprep.subr.mxu0 %v157
    %369 = vmatpush2.msra.mxu0 %v156
    %370 = vmatprep.subr.mxu0 %v153
    %371 = vmatpush2.msra.mxu0 %v152
    %372 = vmatprep.subr.mxu0 %v149
    %373 = vmatpush2.msra.mxu0 %v148
    %374 = vmatprep.subr.mxu0 %v145
    %375 = vmatpush2.msra.mxu0 %v144
    %376 = vmatprep.subr.mxu0 %v141
    %377 = vmatpush2.msra.mxu0 %v140
    %378 = vmatprep.subr.mxu0 %v137
    %379 = vmatpush2.msra.mxu0 %v136
    %380 = vmatprep.subr.mxu0 %v133
    %381 = vmatpush2.msra.mxu0 %v132
    %382 = vmatprep.subr.mxu0 %v129
    %383 = vmatpush2.msra.mxu0 %v128
    %384 = vmatprep.subr.mxu0 %v125
    %385 = vmatpush2.msra.mxu0 %v124
    %386 = vmatprep.subr.mxu0 %v121
    %387 = vmatpush2.msra.mxu0 %v120
    %388 = vmatprep.subr.mxu0 %v117
    %389 = vmatpush2.msra.mxu0 %v116
    %390 = vmatprep.mubr.f32.mxu0 %v325
    %391 = vmatmul.mubr.f32.gmra.mxu0 %v324
    %v392 = vpop.f32.mrf.mxu0
    %v393 = vadd.f32 0.0, %v392
    %v394 = vpop.f32.mrf.mxu0
    %v395 = vadd.f32 0.0, %v394
    %396 = vdwg.mxu0
    %397 = vmatprep.subr.mxu0 %v115
    %398 = vmatpush1.msra.mxu0 %v114
    %399 = vmatprep.subr.mxu0 %v111
    %400 = vmatpush1.msra.mxu0 %v110
    %401 = vmatprep.subr.mxu0 %v107
    %402 = vmatpush1.msra.mxu0 %v106
    %403 = vmatprep.subr.mxu0 %v103
    %404 = vmatpush1.msra.mxu0 %v102
    %405 = vmatprep.subr.mxu0 %v99
    %406 = vmatpush1.msra.mxu0 %v98
    %407 = vmatprep.subr.mxu0 %v95
    %408 = vmatpush1.msra.mxu0 %v94
    %409 = vmatprep.subr.mxu0 %v91
    %410 = vmatpush1.msra.mxu0 %v90
    %411 = vmatprep.subr.mxu0 %v87
    %412 = vmatpush1.msra.mxu0 %v86
    %413 = vmatprep.subr.mxu0 %v83
    %414 = vmatpush1.msra.mxu0 %v82
    %415 = vmatprep.subr.mxu0 %v79
    %416 = vmatpush1.msra.mxu0 %v78
    %417 = vmatprep.subr.mxu0 %v75
    %418 = vmatpush1.msra.mxu0 %v74
    %419 = vmatprep.subr.mxu0 %v71
    %420 = vmatpush1.msra.mxu0 %v70
    %421 = vmatprep.subr.mxu0 %v67
    %422 = vmatpush1.msra.mxu0 %v66
    %423 = vmatprep.subr.mxu0 %v63
    %424 = vmatpush1.msra.mxu0 %v62
    %425 = vmatprep.subr.mxu0 %v59
    %426 = vmatpush1.msra.mxu0 %v58
    %427 = vmatprep.subr.mxu0 %v55
    %428 = vmatpush1.msra.mxu0 %v54
    %429 = vmatprep.subr.mxu0 %v179
    %430 = vmatpush2.msra.mxu0 %v178
    %431 = vmatprep.subr.mxu0 %v175
    %432 = vmatpush2.msra.mxu0 %v174
    %433 = vmatprep.subr.mxu0 %v171
    %434 = vmatpush2.msra.mxu0 %v170
    %435 = vmatprep.subr.mxu0 %v167
    %436 = vmatpush2.msra.mxu0 %v166
    %437 = vmatprep.subr.mxu0 %v163
    %438 = vmatpush2.msra.mxu0 %v162
    %439 = vmatprep.subr.mxu0 %v159
    %440 = vmatpush2.msra.mxu0 %v158
    %441 = vmatprep.subr.mxu0 %v155
    %442 = vmatpush2.msra.mxu0 %v154
    %443 = vmatprep.subr.mxu0 %v151
    %444 = vmatpush2.msra.mxu0 %v150
    %445 = vmatprep.subr.mxu0 %v147
    %446 = vmatpush2.msra.mxu0 %v146
    %447 = vmatprep.subr.mxu0 %v143
    %448 = vmatpush2.msra.mxu0 %v142
    %449 = vmatprep.subr.mxu0 %v139
    %450 = vmatpush2.msra.mxu0 %v138
    %451 = vmatprep.subr.mxu0 %v135
    %452 = vmatpush2.msra.mxu0 %v134
    %453 = vmatprep.subr.mxu0 %v131
    %454 = vmatpush2.msra.mxu0 %v130
    %455 = vmatprep.subr.mxu0 %v127
    %456 = vmatpush2.msra.mxu0 %v126
    %457 = vmatprep.subr.mxu0 %v123
    %458 = vmatpush2.msra.mxu0 %v122
    %459 = vmatprep.subr.mxu0 %v119
    %460 = vmatpush2.msra.mxu0 %v118
    %461 = vmatprep.mubr.f32.mxu0 %v325
    %462 = vmatmul.mubr.f32.gmra.mxu0 %v324
    %v463 = vpop.f32.mrf.mxu0
    %v464 = vadd.f32 0.0, %v463
    %v465 = vpop.f32.mrf.mxu0
    %v466 = vadd.f32 0.0, %v465
    %467 = vdwg.mxu0
    %v468 = vmul.f32 %v249, %v249
    %v469 = vmul.f32 %v251, %v251
    %v470 = vmul.f32 %v320, %v320
    %v471 = vmul.f32 %v322, %v322
    %v472 = vadd.f32 %v468, %v470
    %v473 = vadd.f32 %v469, %v471
    %v474 = vrsqrt.pop %v472
    %v475 = vmul.f32 %v472, %v474
    %vm476 = vcmp.eq.f32.partialorder %v472, inf
    %v477 = vsel %vm476, %v472, %v475
    %vm478 = vcmp.eq.f32.partialorder %v472, 0.0
    %v479 = vand.u32 %v472, 2147483648
    %v480 = vsel %vm478, %v479, %v477
    %v481 = vrsqrt.pop %v473
    %v482 = vmul.f32 %v473, %v481
    %vm483 = vcmp.eq.f32.partialorder %v473, inf
    %v484 = vsel %vm483, %v473, %v482
    %vm485 = vcmp.eq.f32.partialorder %v473, 0.0
    %v486 = vand.u32 %v473, 2147483648
    %v487 = vsel %vm485, %v486, %v484
    %v488 = vmul.f32 %v393, %v393
    %v489 = vmul.f32 %v395, %v395
    %v490 = vmul.f32 %v464, %v464
    %v491 = vmul.f32 %v466, %v466
    %v492 = vadd.f32 %v488, %v490
    %v493 = vadd.f32 %v489, %v491
    %v494 = vrsqrt.pop %v492
    %v495 = vmul.f32 %v492, %v494
    %vm496 = vcmp.eq.f32.partialorder %v492, inf
    %v497 = vsel %vm496, %v492, %v495
    %vm498 = vcmp.eq.f32.partialorder %v492, 0.0
    %v499 = vand.u32 %v492, 2147483648
    %v500 = vsel %vm498, %v499, %v497
    %v501 = vrsqrt.pop %v493
    %v502 = vmul.f32 %v493, %v501
    %vm503 = vcmp.eq.f32.partialorder %v493, inf
    %v504 = vsel %vm503, %v493, %v502
    %vm505 = vcmp.eq.f32.partialorder %v493, 0.0
    %v506 = vand.u32 %v493, 2147483648
    %v507 = vsel %vm505, %v506, %v504
    %v508 = vsub.f32 %v480, %v500
    %v509 = vsub.f32 %v487, %v507
    %v510 = vand.u32 2147483647, %v508
    %v511 = vand.u32 2147483647, %v509
    %v512 = vrot.slane %v510, 4
    %v513 = vadd.f32 %v510, %v512
    %v514 = vrot.slane %v513, 2
    %v515 = vadd.f32 %v513, %v514
    %v516 = vrot.slane %v515, 1
    %v517 = vadd.f32 %v515, %v516
    %v518 = vrot.slane %v511, 4
    %v519 = vadd.f32 %v511, %v518
    %v520 = vrot.slane %v519, 2
    %v521 = vadd.f32 %v519, %v520
    %v522 = vrot.slane %v521, 1
    %v523 = vadd.f32 %v521, %v522
    %524 = vst [vmem:[#allocation8] sm:$0xff] %v517
    %525 = vst [vmem:[#allocation8 + $0x8] sm:$0xff] %v523
    // Predicated region
    $region26: #{tpu_custom_call.1} parent=1 // pred_check
      _
    $region27: #{tpu_custom_call.1} parent=1 // pred_check_branch
      %527 = sbr.rel (0) target = $region29
    $region28: #{tpu_custom_call.1} parent=1 // pred_region
      %s529 = ssub.s32 256, 256
      %530 = vsyncadd [#allocation4], %s529
      %s532 = sshll.u32 [#allocation8], 4
      %s533 = int_to_ptr.vmem [resolvable:$true] %s532
      %535 = dma.vmem_to_hbm [thread:$0]  %s533, 256, %s3, [#allocation4]
    $region29: #{tpu_custom_call.1} parent=1 // pred_fallthru
      _
    // Predicated region
    $region30: #{tpu_custom_call.1} parent=1 // pred_check
      _
    $region31: #{tpu_custom_call.1} parent=1 // pred_check_branch
      %537 = sbr.rel (0) target = $region33
    $region32: #{tpu_custom_call.1} parent=1 // pred_region
      %538 = dma.done [#allocation4], 256
    $region33: #{tpu_custom_call.1} parent=1 // pred_fallthru
      _
    %539 = vsyncpa [#allocation3], 1
    %540 = vsyncpa [#allocation6], 1
    %541 = vsyncpa [#allocation4], 1

// kernel: tpu_custom_call.1
$region0: #{tpu_custom_call.1}
  #allocation0 [shape = 'u32[]', space=smem, size = 0x4, offset = 0x4, fixed_abs, tag = 'smem constant byte address 0x4 - core index']
  #allocation1 [shape = 'u32[144,128]{1,0:T(1,128)}', space=vmem, size = 0x12000, scoped, tag = 'internal scratch']
  %s0 = inlined_call_operand.hbm [shape: f32[8,256], index: 0, kind: input, shape index: {}]
  %s1 = inlined_call_operand.hbm [shape: f32[8,256], index: 1, kind: input, shape index: {}]
  %s2 = inlined_call_operand.hbm [shape: f32[256,512], index: 2, kind: input, shape index: {}]
  %s3 = inlined_call_operand.hbm [shape: f32[1,8,256], index: 3, kind: output, shape index: {}]
  %s4 = sld [smem:[#allocation0]]
  $region34: #{tpu_custom_call.1} parent=0
    _
  %s6 = ssub.s32 1, %s4
  %s7 = scalar_select 0, %s6, %s4
  $region1: #{tpu_custom_call.1} parent=0
    #allocation2 [shape = 'u8[8192]{0}', space=vmem, size = 0x2000, scoped, tag = 'input window, operand 0, single buffered']
    #allocation3 [shape = 's32[1]{0}', space=sflag, size = 0x4, scoped, tag = 'scoped memory for tpu_custom_call.1']
    #allocation4 [shape = 's32[1]{0}', space=sflag, size = 0x4, scoped, tag = 'scoped memory for tpu_custom_call.1']
    #allocation5 [shape = 'u8[8192]{0}', space=vmem, size = 0x2000, scoped, tag = 'input window, operand 1, single buffered']
    #allocation6 [shape = 's32[1]{0}', space=sflag, size = 0x4, scoped, tag = 'scoped memory for tpu_custom_call.1']
    #allocation7 [shape = 'u8[524288]{0}', space=vmem, size = 0x80000, scoped, tag = 'input window, operand 2, single buffered']
    #allocation8 [shape = 'u8[8192]{0}', space=vmem, size = 0x2000, scoped, tag = 'output window, operand 0, single buffered']
    %8 = vsyncpa [#allocation3], 0
    %9 = vsyncpa [#allocation6], 0
    %10 = vsyncpa [#allocation4], 0
    // Predicated region
    $region2: #{tpu_custom_call.1} parent=1 // pred_check
      _
    $region3: #{tpu_custom_call.1} parent=1 // pred_check_branch
      %12 = sbr.rel (0) target = $region5
    $region4: #{tpu_custom_call.1} parent=1 // pred_region
      %s14 = ssub.s32 256, 256
      %15 = vsyncadd [#allocation3], %s14
      %s17 = sshll.u32 [#allocation2], 4
      %s18 = int_to_ptr.vmem [resolvable:$true] %s17
      %20 = dma.hbm_to_vmem [thread:$0]  %s0, 256, %s18, [#allocation3]
    $region5: #{tpu_custom_call.1} parent=1 // pred_fallthru
      _
    // Predicated region
    $region6: #{tpu_custom_call.1} parent=1 // pred_check
      _
    $region7: #{tpu_custom_call.1} parent=1 // pred_check_branch
      %22 = sbr.rel (0) target = $region9
    $region8: #{tpu_custom_call.1} parent=1 // pred_region
      %s24 = ssub.s32 256, 256
      %25 = vsyncadd [#allocation6], %s24
      %s27 = sshll.u32 [#allocation5], 4
      %s28 = int_to_ptr.vmem [resolvable:$true] %s27
      %30 = dma.hbm_to_vmem [thread:$0]  %s1, 256, %s28, [#allocation6]
    $region9: #{tpu_custom_call.1} parent=1 // pred_fallthru
      _
    // Predicated region
    $region10: #{tpu_custom_call.1} parent=1 // pred_check
      _
    $region11: #{tpu_custom_call.1} parent=1 // pred_check_branch
      %32 = sbr.rel (0) target = $region13
    $region12: #{tpu_custom_call.1} parent=1 // pred_region
      %s34 = ssub.s32 16384, 16384
      %35 = vsyncadd [#allocation6], %s34
      %s36 = sshll.u32 [#allocation7], 4
      %s37 = int_to_ptr.vmem [resolvable:$true] %s36
      %42 = dma.hbm_to_vmem [thread:$0]  %s2, 16384, %s37, [#allocation6], 512, 512, 32
    $region13: #{tpu_custom_call.1} parent=1 // pred_fallthru
      _
    // Predicated region
    $region14: #{tpu_custom_call.1} parent=1 // pred_check
      _
    $region15: #{tpu_custom_call.1} parent=1 // pred_check_branch
      %44 = sbr.rel (0) target = $region17
    $region16: #{tpu_custom_call.1} parent=1 // pred_region
      %45 = dma.done [#allocation3], 256
    $region17: #{tpu_custom_call.1} parent=1 // pred_fallthru
      _
    // Predicated region
    $region18: #{tpu_custom_call.1} parent=1 // pred_check
      _
    $region19: #{tpu_custom_call.1} parent=1 // pred_check_branch
      %47 = sbr.rel (0) target = $region21
    $region20: #{tpu_custom_call.1} parent=1 // pred_region
      %48 = dma.done [#allocation6], 256
    $region21: #{tpu_custom_call.1} parent=1 // pred_fallthru
      _
    // Predicated region
    $region22: #{tpu_custom_call.1} parent=1 // pred_check
      _
    $region23: #{tpu_custom_call.1} parent=1 // pred_check_branch
      %50 = sbr.rel (0) target = $region25
    $region24: #{tpu_custom_call.1} parent=1 // pred_region
      %51 = dma.done [#allocation6], 16384
    $region25: #{tpu_custom_call.1} parent=1 // pred_fallthru
      _
    %v52 = vld [vmem:[#allocation7] sm:$0xff]
    %v53 = vld [vmem:[#allocation7 + $0x8] sm:$0xff]
    %v54 = vld [vmem:[#allocation7 + $0x10] sm:$0xff]
    %v55 = vld [vmem:[#allocation7 + $0x18] sm:$0xff]
    %v56 = vld [vmem:[#allocation7 + $0x20] sm:$0xff]
    %v57 = vld [vmem:[#allocation7 + $0x28] sm:$0xff]
    %v58 = vld [vmem:[#allocation7 + $0x30] sm:$0xff]
    %v59 = vld [vmem:[#allocation7 + $0x38] sm:$0xff]
    %v60 = vld [vmem:[#allocation7 + $0x40] sm:$0xff]
    %v61 = vld [vmem:[#allocation7 + $0x48] sm:$0xff]
    %v62 = vld [vmem:[#allocation7 + $0x50] sm:$0xff]
    %v63 = vld [vmem:[#allocation7 + $0x58] sm:$0xff]
    %v64 = vld [vmem:[#allocation7 + $0x60] sm:$0xff]
    %v65 = vld [vmem:[#allocation7 + $0x68] sm:$0xff]
    %v66 = vld [vmem:[#allocation7 + $0x70] sm:$0xff]
    %v67 = vld [vmem:[#allocation7 + $0x78] sm:$0xff]
    %v68 = vld [vmem:[#allocation7 + $0x80] sm:$0xff]
    %v69 = vld [vmem:[#allocation7 + $0x88] sm:$0xff]
    %v70 = vld [vmem:[#allocation7 + $0x90] sm:$0xff]
    %v71 = vld [vmem:[#allocation7 + $0x98] sm:$0xff]
    %v72 = vld [vmem:[#allocation7 + $0xa0] sm:$0xff]
    %v73 = vld [vmem:[#allocation7 + $0xa8] sm:$0xff]
    %v74 = vld [vmem:[#allocation7 + $0xb0] sm:$0xff]
    %v75 = vld [vmem:[#allocation7 + $0xb8] sm:$0xff]
    %v76 = vld [vmem:[#allocation7 + $0xc0] sm:$0xff]
    %v77 = vld [vmem:[#allocation7 + $0xc8] sm:$0xff]
    %v78 = vld [vmem:[#allocation7 + $0xd0] sm:$0xff]
    %v79 = vld [vmem:[#allocation7 + $0xd8] sm:$0xff]
    %v80 = vld [vmem:[#allocation7 + $0xe0] sm:$0xff]
    %v81 = vld [vmem:[#allocation7 + $0xe8] sm:$0xff]
    %v82 = vld [vmem:[#allocation7 + $0xf0] sm:$0xff]
    %v83 = vld [vmem:[#allocation7 + $0xf8] sm:$0xff]
    %v84 = vld [vmem:[#allocation7 + $0x100] sm:$0xff]
    %v85 = vld [vmem:[#allocation7 + $0x108] sm:$0xff]
    %v86 = vld [vmem:[#allocation7 + $0x110] sm:$0xff]
    %v87 = vld [vmem:[#allocation7 + $0x118] sm:$0xff]
    %v88 = vld [vmem:[#allocation7 + $0x120] sm:$0xff]
    %v89 = vld [vmem:[#allocation7 + $0x128] sm:$0xff]
    %v90 = vld [vmem:[#allocation7 + $0x130] sm:$0xff]
    %v91 = vld [vmem:[#allocation7 + $0x138] sm:$0xff]
    %v92 = vld [vmem:[#allocation7 + $0x140] sm:$0xff]
    %v93 = vld [vmem:[#allocation7 + $0x148] sm:$0xff]
    %v94 = vld [vmem:[#allocation7 + $0x150] sm:$0xff]
    %v95 = vld [vmem:[#allocation7 + $0x158] sm:$0xff]
    %v96 = vld [vmem:[#allocation7 + $0x160] sm:$0xff]
    %v97 = vld [vmem:[#allocation7 + $0x168] sm:$0xff]
    %v98 = vld [vmem:[#allocation7 + $0x170] sm:$0xff]
    %v99 = vld [vmem:[#allocation7 + $0x178] sm:$0xff]
    %v100 = vld [vmem:[#allocation7 + $0x180] sm:$0xff]
    %v101 = vld [vmem:[#allocation7 + $0x188] sm:$0xff]
    %v102 = vld [vmem:[#allocation7 + $0x190] sm:$0xff]
    %v103 = vld [vmem:[#allocation7 + $0x198] sm:$0xff]
    %v104 = vld [vmem:[#allocation7 + $0x1a0] sm:$0xff]
    %v105 = vld [vmem:[#allocation7 + $0x1a8] sm:$0xff]
    %v106 = vld [vmem:[#allocation7 + $0x1b0] sm:$0xff]
    %v107 = vld [vmem:[#allocation7 + $0x1b8] sm:$0xff]
    %v108 = vld [vmem:[#allocation7 + $0x1c0] sm:$0xff]
    %v109 = vld [vmem:[#allocation7 + $0x1c8] sm:$0xff]
    %v110 = vld [vmem:[#allocation7 + $0x1d0] sm:$0xff]
    %v111 = vld [vmem:[#allocation7 + $0x1d8] sm:$0xff]
    %v112 = vld [vmem:[#allocation7 + $0x1e0] sm:$0xff]
    %v113 = vld [vmem:[#allocation7 + $0x1e8] sm:$0xff]
    %v114 = vld [vmem:[#allocation7 + $0x1f0] sm:$0xff]
    %v115 = vld [vmem:[#allocation7 + $0x1f8] sm:$0xff]
    %v116 = vld [vmem:[#allocation7 + $0x200] sm:$0xff]
    %v117 = vld [vmem:[#allocation7 + $0x208] sm:$0xff]
    %v118 = vld [vmem:[#allocation7 + $0x210] sm:$0xff]
    %v119 = vld [vmem:[#allocation7 + $0x218] sm:$0xff]
    %v120 = vld [vmem:[#allocation7 + $0x220] sm:$0xff]
    %v121 = vld [vmem:[#allocation7 + $0x228] sm:$0xff]
    %v122 = vld [vmem:[#allocation7 + $0x230] sm:$0xff]
    %v123 = vld [vmem:[#allocation7 + $0x238] sm:$0xff]
    %v124 = vld [vmem:[#allocation7 + $0x240] sm:$0xff]
    %v125 = vld [vmem:[#allocation7 + $0x248] sm:$0xff]
    %v126 = vld [vmem:[#allocation7 + $0x250] sm:$0xff]
    %v127 = vld [vmem:[#allocation7 + $0x258] sm:$0xff]
    %v128 = vld [vmem:[#allocation7 + $0x260] sm:$0xff]
    %v129 = vld [vmem:[#allocation7 + $0x268] sm:$0xff]
    %v130 = vld [vmem:[#allocation7 + $0x270] sm:$0xff]
    %v131 = vld [vmem:[#allocation7 + $0x278] sm:$0xff]
    %v132 = vld [vmem:[#allocation7 + $0x280] sm:$0xff]
    %v133 = vld [vmem:[#allocation7 + $0x288] sm:$0xff]
    %v134 = vld [vmem:[#allocation7 + $0x290] sm:$0xff]
    %v135 = vld [vmem:[#allocation7 + $0x298] sm:$0xff]
    %v136 = vld [vmem:[#allocation7 + $0x2a0] sm:$0xff]
    %v137 = vld [vmem:[#allocation7 + $0x2a8] sm:$0xff]
    %v138 = vld [vmem:[#allocation7 + $0x2b0] sm:$0xff]
    %v139 = vld [vmem:[#allocation7 + $0x2b8] sm:$0xff]
    %v140 = vld [vmem:[#allocation7 + $0x2c0] sm:$0xff]
    %v141 = vld [vmem:[#allocation7 + $0x2c8] sm:$0xff]
    %v142 = vld [vmem:[#allocation7 + $0x2d0] sm:$0xff]
    %v143 = vld [vmem:[#allocation7 + $0x2d8] sm:$0xff]
    %v144 = vld [vmem:[#allocation7 + $0x2e0] sm:$0xff]
    %v145 = vld [vmem:[#allocation7 + $0x2e8] sm:$0xff]
    %v146 = vld [vmem:[#allocation7 + $0x2f0] sm:$0xff]
    %v147 = vld [vmem:[#allocation7 + $0x2f8] sm:$0xff]
    %v148 = vld [vmem:[#allocation7 + $0x300] sm:$0xff]
    %v149 = vld [vmem:[#allocation7 + $0x308] sm:$0xff]
    %v150 = vld [vmem:[#allocation7 + $0x310] sm:$0xff]
    %v151 = vld [vmem:[#allocation7 + $0x318] sm:$0xff]
    %v152 = vld [vmem:[#allocation7 + $0x320] sm:$0xff]
    %v153 = vld [vmem:[#allocation7 + $0x328] sm:$0xff]
    %v154 = vld [vmem:[#allocation7 + $0x330] sm:$0xff]
    %v155 = vld [vmem:[#allocation7 + $0x338] sm:$0xff]
    %v156 = vld [vmem:[#allocation7 + $0x340] sm:$0xff]
    %v157 = vld [vmem:[#allocation7 + $0x348] sm:$0xff]
    %v158 = vld [vmem:[#allocation7 + $0x350] sm:$0xff]
    %v159 = vld [vmem:[#allocation7 + $0x358] sm:$0xff]
    %v160 = vld [vmem:[#allocation7 + $0x360] sm:$0xff]
    %v161 = vld [vmem:[#allocation7 + $0x368] sm:$0xff]
    %v162 = vld [vmem:[#allocation7 + $0x370] sm:$0xff]
    %v163 = vld [vmem:[#allocation7 + $0x378] sm:$0xff]
    %v164 = vld [vmem:[#allocation7 + $0x380] sm:$0xff]
    %v165 = vld [vmem:[#allocation7 + $0x388] sm:$0xff]
    %v166 = vld [vmem:[#allocation7 + $0x390] sm:$0xff]
    %v167 = vld [vmem:[#allocation7 + $0x398] sm:$0xff]
    %v168 = vld [vmem:[#allocation7 + $0x3a0] sm:$0xff]
    %v169 = vld [vmem:[#allocation7 + $0x3a8] sm:$0xff]
    %v170 = vld [vmem:[#allocation7 + $0x3b0] sm:$0xff]
    %v171 = vld [vmem:[#allocation7 + $0x3b8] sm:$0xff]
    %v172 = vld [vmem:[#allocation7 + $0x3c0] sm:$0xff]
    %v173 = vld [vmem:[#allocation7 + $0x3c8] sm:$0xff]
    %v174 = vld [vmem:[#allocation7 + $0x3d0] sm:$0xff]
    %v175 = vld [vmem:[#allocation7 + $0x3d8] sm:$0xff]
    %v176 = vld [vmem:[#allocation7 + $0x3e0] sm:$0xff]
    %v177 = vld [vmem:[#allocation7 + $0x3e8] sm:$0xff]
    %v178 = vld [vmem:[#allocation7 + $0x3f0] sm:$0xff]
    %v179 = vld [vmem:[#allocation7 + $0x3f8] sm:$0xff]
    %v180 = vld [vmem:[#allocation2] sm:$0xff]
    %v181 = vld [vmem:[#allocation2 + $0x8] sm:$0xff]
    %182 = vmatprep.subr.mxu0 %v113
    %183 = vmatpush1.msra.mxu0 %v112
    %184 = vmatprep.subr.mxu0 %v109
    %185 = vmatpush1.msra.mxu0 %v108
    %186 = vmatprep.subr.mxu0 %v105
    %187 = vmatpush1.msra.mxu0 %v104
    %188 = vmatprep.subr.mxu0 %v101
    %189 = vmatpush1.msra.mxu0 %v100
    %190 = vmatprep.subr.mxu0 %v97
    %191 = vmatpush1.msra.mxu0 %v96
    %192 = vmatprep.subr.mxu0 %v93
    %193 = vmatpush1.msra.mxu0 %v92
    %194 = vmatprep.subr.mxu0 %v89
    %195 = vmatpush1.msra.mxu0 %v88
    %196 = vmatprep.subr.mxu0 %v85
    %197 = vmatpush1.msra.mxu0 %v84
    %198 = vmatprep.subr.mxu0 %v81
    %199 = vmatpush1.msra.mxu0 %v80
    %200 = vmatprep.subr.mxu0 %v77
    %201 = vmatpush1.msra.mxu0 %v76
    %202 = vmatprep.subr.mxu0 %v73
    %203 = vmatpush1.msra.mxu0 %v72
    %204 = vmatprep.subr.mxu0 %v69
    %205 = vmatpush1.msra.mxu0 %v68
    %206 = vmatprep.subr.mxu0 %v65
    %207 = vmatpush1.msra.mxu0 %v64
    %208 = vmatprep.subr.mxu0 %v61
    %209 = vmatpush1.msra.mxu0 %v60
    %210 = vmatprep.subr.mxu0 %v57
    %211 = vmatpush1.msra.mxu0 %v56
    %212 = vmatprep.subr.mxu0 %v53
    %213 = vmatpush1.msra.mxu0 %v52
    %214 = vmatprep.subr.mxu0 %v177
    %215 = vmatpush2.msra.mxu0 %v176
    %216 = vmatprep.subr.mxu0 %v173
    %217 = vmatpush2.msra.mxu0 %v172
    %218 = vmatprep.subr.mxu0 %v169
    %219 = vmatpush2.msra.mxu0 %v168
    %220 = vmatprep.subr.mxu0 %v165
    %221 = vmatpush2.msra.mxu0 %v164
    %222 = vmatprep.subr.mxu0 %v161
    %223 = vmatpush2.msra.mxu0 %v160
    %224 = vmatprep.subr.mxu0 %v157
    %225 = vmatpush2.msra.mxu0 %v156
    %226 = vmatprep.subr.mxu0 %v153
    %227 = vmatpush2.msra.mxu0 %v152
    %228 = vmatprep.subr.mxu0 %v149
    %229 = vmatpush2.msra.mxu0 %v148
    %230 = vmatprep.subr.mxu0 %v145
    %231 = vmatpush2.msra.mxu0 %v144
    %232 = vmatprep.subr.mxu0 %v141
    %233 = vmatpush2.msra.mxu0 %v140
    %234 = vmatprep.subr.mxu0 %v137
    %235 = vmatpush2.msra.mxu0 %v136
    %236 = vmatprep.subr.mxu0 %v133
    %237 = vmatpush2.msra.mxu0 %v132
    %238 = vmatprep.subr.mxu0 %v129
    %239 = vmatpush2.msra.mxu0 %v128
    %240 = vmatprep.subr.mxu0 %v125
    %241 = vmatpush2.msra.mxu0 %v124
    %242 = vmatprep.subr.mxu0 %v121
    %243 = vmatpush2.msra.mxu0 %v120
    %244 = vmatprep.subr.mxu0 %v117
    %245 = vmatpush2.msra.mxu0 %v116
    %246 = vmatprep.mubr.f32.mxu0 %v181
    %247 = vmatmul.mubr.f32.gmra.mxu0 %v180
    %v248 = vpop.f32.mrf.mxu0
    %v249 = vadd.f32 0.0, %v248
    %v250 = vpop.f32.mrf.mxu0
    %v251 = vadd.f32 0.0, %v250
    %252 = vdwg.mxu0
    %253 = vmatprep.subr.mxu0 %v115
    %254 = vmatpush1.msra.mxu0 %v114
    %255 = vmatprep.subr.mxu0 %v111
    %256 = vmatpush1.msra.mxu0 %v110
    %257 = vmatprep.subr.mxu0 %v107
    %258 = vmatpush1.msra.mxu0 %v106
    %259 = vmatprep.subr.mxu0 %v103
    %260 = vmatpush1.msra.mxu0 %v102
    %261 = vmatprep.subr.mxu0 %v99
    %262 = vmatpush1.msra.mxu0 %v98
    %263 = vmatprep.subr.mxu0 %v95
    %264 = vmatpush1.msra.mxu0 %v94
    %265 = vmatprep.subr.mxu0 %v91
    %266 = vmatpush1.msra.mxu0 %v90
    %267 = vmatprep.subr.mxu0 %v87
    %268 = vmatpush1.msra.mxu0 %v86
    %269 = vmatprep.subr.mxu0 %v83
    %270 = vmatpush1.msra.mxu0 %v82
    %271 = vmatprep.subr.mxu0 %v79
    %272 = vmatpush1.msra.mxu0 %v78
    %273 = vmatprep.subr.mxu0 %v75
    %274 = vmatpush1.msra.mxu0 %v74
    %275 = vmatprep.subr.mxu0 %v71
    %276 = vmatpush1.msra.mxu0 %v70
    %277 = vmatprep.subr.mxu0 %v67
    %278 = vmatpush1.msra.mxu0 %v66
    %279 = vmatprep.subr.mxu0 %v63
    %280 = vmatpush1.msra.mxu0 %v62
    %281 = vmatprep.subr.mxu0 %v59
    %282 = vmatpush1.msra.mxu0 %v58
    %283 = vmatprep.subr.mxu0 %v55
    %284 = vmatpush1.msra.mxu0 %v54
    %285 = vmatprep.subr.mxu0 %v179
    %286 = vmatpush2.msra.mxu0 %v178
    %287 = vmatprep.subr.mxu0 %v175
    %288 = vmatpush2.msra.mxu0 %v174
    %289 = vmatprep.subr.mxu0 %v171
    %290 = vmatpush2.msra.mxu0 %v170
    %291 = vmatprep.subr.mxu0 %v167
    %292 = vmatpush2.msra.mxu0 %v166
    %293 = vmatprep.subr.mxu0 %v163
    %294 = vmatpush2.msra.mxu0 %v162
    %295 = vmatprep.subr.mxu0 %v159
    %296 = vmatpush2.msra.mxu0 %v158
    %297 = vmatprep.subr.mxu0 %v155
    %298 = vmatpush2.msra.mxu0 %v154
    %299 = vmatprep.subr.mxu0 %v151
    %300 = vmatpush2.msra.mxu0 %v150
    %301 = vmatprep.subr.mxu0 %v147
    %302 = vmatpush2.msra.mxu0 %v146
    %303 = vmatprep.subr.mxu0 %v143
    %304 = vmatpush2.msra.mxu0 %v142
    %305 = vmatprep.subr.mxu0 %v139
    %306 = vmatpush2.msra.mxu0 %v138
    %307 = vmatprep.subr.mxu0 %v135
    %308 = vmatpush2.msra.mxu0 %v134
    %309 = vmatprep.subr.mxu0 %v131
    %310 = vmatpush2.msra.mxu0 %v130
    %311 = vmatprep.subr.mxu0 %v127
    %312 = vmatpush2.msra.mxu0 %v126
    %313 = vmatprep.subr.mxu0 %v123
    %314 = vmatpush2.msra.mxu0 %v122
    %315 = vmatprep.subr.mxu0 %v119
    %316 = vmatpush2.msra.mxu0 %v118
    %317 = vmatprep.mubr.f32.mxu0 %v181
    %318 = vmatmul.mubr.f32.gmra.mxu0 %v180
    %v319 = vpop.f32.mrf.mxu0
    %v320 = vadd.f32 0.0, %v319
    %v321 = vpop.f32.mrf.mxu0
    %v322 = vadd.f32 0.0, %v321
    %323 = vdwg.mxu0
    %v324 = vld [vmem:[#allocation5] sm:$0xff]
    %v325 = vld [vmem:[#allocation5 + $0x8] sm:$0xff]
    %326 = vmatprep.subr.mxu0 %v113
    %327 = vmatpush1.msra.mxu0 %v112
    %328 = vmatprep.subr.mxu0 %v109
    %329 = vmatpush1.msra.mxu0 %v108
    %330 = vmatprep.subr.mxu0 %v105
    %331 = vmatpush1.msra.mxu0 %v104
    %332 = vmatprep.subr.mxu0 %v101
    %333 = vmatpush1.msra.mxu0 %v100
    %334 = vmatprep.subr.mxu0 %v97
    %335 = vmatpush1.msra.mxu0 %v96
    %336 = vmatprep.subr.mxu0 %v93
    %337 = vmatpush1.msra.mxu0 %v92
    %338 = vmatprep.subr.mxu0 %v89
    %339 = vmatpush1.msra.mxu0 %v88
    %340 = vmatprep.subr.mxu0 %v85
    %341 = vmatpush1.msra.mxu0 %v84
    %342 = vmatprep.subr.mxu0 %v81
    %343 = vmatpush1.msra.mxu0 %v80
    %344 = vmatprep.subr.mxu0 %v77
    %345 = vmatpush1.msra.mxu0 %v76
    %346 = vmatprep.subr.mxu0 %v73
    %347 = vmatpush1.msra.mxu0 %v72
    %348 = vmatprep.subr.mxu0 %v69
    %349 = vmatpush1.msra.mxu0 %v68
    %350 = vmatprep.subr.mxu0 %v65
    %351 = vmatpush1.msra.mxu0 %v64
    %352 = vmatprep.subr.mxu0 %v61
    %353 = vmatpush1.msra.mxu0 %v60
    %354 = vmatprep.subr.mxu0 %v57
    %355 = vmatpush1.msra.mxu0 %v56
    %356 = vmatprep.subr.mxu0 %v53
    %357 = vmatpush1.msra.mxu0 %v52
    %358 = vmatprep.subr.mxu0 %v177
    %359 = vmatpush2.msra.mxu0 %v176
    %360 = vmatprep.subr.mxu0 %v173
    %361 = vmatpush2.msra.mxu0 %v172
    %362 = vmatprep.subr.mxu0 %v169
    %363 = vmatpush2.msra.mxu0 %v168
    %364 = vmatprep.subr.mxu0 %v165
    %365 = vmatpush2.msra.mxu0 %v164
    %366 = vmatprep.subr.mxu0 %v161
    %367 = vmatpush2.msra.mxu0 %v160
    %368 = vmatprep.subr.mxu0 %v157
    %369 = vmatpush2.msra.mxu0 %v156
    %370 = vmatprep.subr.mxu0 %v153
    %371 = vmatpush2.msra.mxu0 %v152
    %372 = vmatprep.subr.mxu0 %v149
    %373 = vmatpush2.msra.mxu0 %v148
    %374 = vmatprep.subr.mxu0 %v145
    %375 = vmatpush2.msra.mxu0 %v144
    %376 = vmatprep.subr.mxu0 %v141
    %377 = vmatpush2.msra.mxu0 %v140
    %378 = vmatprep.subr.mxu0 %v137
    %379 = vmatpush2.msra.mxu0 %v136
    %380 = vmatprep.subr.mxu0 %v133
    %381 = vmatpush2.msra.mxu0 %v132
    %382 = vmatprep.subr.mxu0 %v129
    %383 = vmatpush2.msra.mxu0 %v128
    %384 = vmatprep.subr.mxu0 %v125
    %385 = vmatpush2.msra.mxu0 %v124
    %386 = vmatprep.subr.mxu0 %v121
    %387 = vmatpush2.msra.mxu0 %v120
    %388 = vmatprep.subr.mxu0 %v117
    %389 = vmatpush2.msra.mxu0 %v116
    %390 = vmatprep.mubr.f32.mxu0 %v325
    %391 = vmatmul.mubr.f32.gmra.mxu0 %v324
    %v392 = vpop.f32.mrf.mxu0
    %v393 = vadd.f32 0.0, %v392
    %v394 = vpop.f32.mrf.mxu0
    %v395 = vadd.f32 0.0, %v394
    %396 = vdwg.mxu0
    %397 = vmatprep.subr.mxu0 %v115
    %398 = vmatpush1.msra.mxu0 %v114
    %399 = vmatprep.subr.mxu0 %v111
    %400 = vmatpush1.msra.mxu0 %v110
    %401 = vmatprep.subr.mxu0 %v107
    %402 = vmatpush1.msra.mxu0 %v106
    %403 = vmatprep.subr.mxu0 %v103
    %404 = vmatpush1.msra.mxu0 %v102
    %405 = vmatprep.subr.mxu0 %v99
    %406 = vmatpush1.msra.mxu0 %v98
    %407 = vmatprep.subr.mxu0 %v95
    %408 = vmatpush1.msra.mxu0 %v94
    %409 = vmatprep.subr.mxu0 %v91
    %410 = vmatpush1.msra.mxu0 %v90
    %411 = vmatprep.subr.mxu0 %v87
    %412 = vmatpush1.msra.mxu0 %v86
    %413 = vmatprep.subr.mxu0 %v83
    %414 = vmatpush1.msra.mxu0 %v82
    %415 = vmatprep.subr.mxu0 %v79
    %416 = vmatpush1.msra.mxu0 %v78
    %417 = vmatprep.subr.mxu0 %v75
    %418 = vmatpush1.msra.mxu0 %v74
    %419 = vmatprep.subr.mxu0 %v71
    %420 = vmatpush1.msra.mxu0 %v70
    %421 = vmatprep.subr.mxu0 %v67
    %422 = vmatpush1.msra.mxu0 %v66
    %423 = vmatprep.subr.mxu0 %v63
    %424 = vmatpush1.msra.mxu0 %v62
    %425 = vmatprep.subr.mxu0 %v59
    %426 = vmatpush1.msra.mxu0 %v58
    %427 = vmatprep.subr.mxu0 %v55
    %428 = vmatpush1.msra.mxu0 %v54
    %429 = vmatprep.subr.mxu0 %v179
    %430 = vmatpush2.msra.mxu0 %v178
    %431 = vmatprep.subr.mxu0 %v175
    %432 = vmatpush2.msra.mxu0 %v174
    %433 = vmatprep.subr.mxu0 %v171
    %434 = vmatpush2.msra.mxu0 %v170
    %435 = vmatprep.subr.mxu0 %v167
    %436 = vmatpush2.msra.mxu0 %v166
    %437 = vmatprep.subr.mxu0 %v163
    %438 = vmatpush2.msra.mxu0 %v162
    %439 = vmatprep.subr.mxu0 %v159
    %440 = vmatpush2.msra.mxu0 %v158
    %441 = vmatprep.subr.mxu0 %v155
    %442 = vmatpush2.msra.mxu0 %v154
    %443 = vmatprep.subr.mxu0 %v151
    %444 = vmatpush2.msra.mxu0 %v150
    %445 = vmatprep.subr.mxu0 %v147
    %446 = vmatpush2.msra.mxu0 %v146
    %447 = vmatprep.subr.mxu0 %v143
    %448 = vmatpush2.msra.mxu0 %v142
    %449 = vmatprep.subr.mxu0 %v139
    %450 = vmatpush2.msra.mxu0 %v138
    %451 = vmatprep.subr.mxu0 %v135
    %452 = vmatpush2.msra.mxu0 %v134
    %453 = vmatprep.subr.mxu0 %v131
    %454 = vmatpush2.msra.mxu0 %v130
    %455 = vmatprep.subr.mxu0 %v127
    %456 = vmatpush2.msra.mxu0 %v126
    %457 = vmatprep.subr.mxu0 %v123
    %458 = vmatpush2.msra.mxu0 %v122
    %459 = vmatprep.subr.mxu0 %v119
    %460 = vmatpush2.msra.mxu0 %v118
    %461 = vmatprep.mubr.f32.mxu0 %v325
    %462 = vmatmul.mubr.f32.gmra.mxu0 %v324
    %v463 = vpop.f32.mrf.mxu0
    %v464 = vadd.f32 0.0, %v463
    %v465 = vpop.f32.mrf.mxu0
    %v466 = vadd.f32 0.0, %v465
    %467 = vdwg.mxu0
    %v468 = vmul.f32 %v249, %v249
    %v469 = vmul.f32 %v251, %v251
    %v470 = vmul.f32 %v320, %v320
    %v471 = vmul.f32 %v322, %v322
    %v472 = vadd.f32 %v468, %v470
    %v473 = vadd.f32 %v469, %v471
    %v474 = vrsqrt.pop %v472
    %v475 = vmul.f32 %v472, %v474
    %vm476 = vcmp.eq.f32.partialorder %v472, inf
    %v477 = vsel %vm476, %v472, %v475
    %vm478 = vcmp.eq.f32.partialorder %v472, 0.0
    %v479 = vand.u32 %v472, 2147483648
    %v480 = vsel %vm478, %v479, %v477
    %v481 = vrsqrt.pop %v473
    %v482 = vmul.f32 %v473, %v481
    %vm483 = vcmp.eq.f32.partialorder %v473, inf
    %v484 = vsel %vm483, %v473, %v482
    %vm485 = vcmp.eq.f32.partialorder %v473, 0.0
    %v486 = vand.u32 %v473, 2147483648
    %v487 = vsel %vm485, %v486, %v484
    %v488 = vmul.f32 %v393, %v393
    %v489 = vmul.f32 %v395, %v395
    %v490 = vmul.f32 %v464, %v464
    %v491 = vmul.f32 %v466, %v466
    %v492 = vadd.f32 %v488, %v490
    %v493 = vadd.f32 %v489, %v491
    %v494 = vrsqrt.pop %v492
    %v495 = vmul.f32 %v492, %v494
    %vm496 = vcmp.eq.f32.partialorder %v492, inf
    %v497 = vsel %vm496, %v492, %v495
    %vm498 = vcmp.eq.f32.partialorder %v492, 0.0
    %v499 = vand.u32 %v492, 2147483648
    %v500 = vsel %vm498, %v499, %v497
    %v501 = vrsqrt.pop %v493
    %v502 = vmul.f32 %v493, %v501
    %vm503 = vcmp.eq.f32.partialorder %v493, inf
    %v504 = vsel %vm503, %v493, %v502
    %vm505 = vcmp.eq.f32.partialorder %v493, 0.0
    %v506 = vand.u32 %v493, 2147483648
    %v507 = vsel %vm505, %v506, %v504
    %v508 = vsub.f32 %v480, %v500
    %v509 = vsub.f32 %v487, %v507
    %v510 = vand.u32 2147483647, %v508
    %v511 = vand.u32 2147483647, %v509
    %v512 = vrot.slane %v510, 4
    %v513 = vadd.f32 %v510, %v512
    %v514 = vrot.slane %v513, 2
    %v515 = vadd.f32 %v513, %v514
    %v516 = vrot.slane %v515, 1
    %v517 = vadd.f32 %v515, %v516
    %v518 = vrot.slane %v511, 4
    %v519 = vadd.f32 %v511, %v518
    %v520 = vrot.slane %v519, 2
    %v521 = vadd.f32 %v519, %v520
    %v522 = vrot.slane %v521, 1
    %v523 = vadd.f32 %v521, %v522
    %524 = vst [vmem:[#allocation8] sm:$0xff] %v517
    %525 = vst [vmem:[#allocation8 + $0x8] sm:$0xff] %v523
    // Predicated region
    $region26: #{tpu_custom_call.1} parent=1 // pred_check
      _
    $region27: #{tpu_custom_call.1} parent=1 // pred_check_branch
      %527 = sbr.rel (0) target = $region29
    $region28: #{tpu_custom_call.1} parent=1 // pred_region
      %s529 = ssub.s32 256, 256
      %530 = vsyncadd [#allocation4], %s529
      %s532 = sshll.u32 [#allocation8], 4
      %s533 = int_to_ptr.vmem [resolvable:$true] %s532
      %535 = dma.vmem_to_hbm [thread:$0]  %s533, 256, %s3, [#allocation4]
    $region29: #{tpu_custom_call.1} parent=1 // pred_fallthru
      _
    // Predicated region
    $region30: #{tpu_custom_call.1} parent=1 // pred_check
      _
    $region31: #{tpu_custom_call.1} parent=1 // pred_check_branch
      %537 = sbr.rel (0) target = $region33
    $region32: #{tpu_custom_call.1} parent=1 // pred_region
      %538 = dma.done [#allocation4], 256
    $region33: #{tpu_custom_call.1} parent=1 // pred_fallthru
      _
    %539 = vsyncpa [#allocation3], 1
    %540 = vsyncpa [#allocation6], 1
    %541 = vsyncpa [#allocation4], 1

</llo_original>
